<compile_context>
chip_gen: v7x
topology: tpu7x:2x2x1
jax: 0.10.0
libtpu: 0.0.40
codegen_flags: <defaults>
</compile_context>

<pallas_src>
import functools

import jax
import jax.numpy as jnp
from jax import lax
from jax.experimental import pallas as pl
from jax.experimental.pallas import tpu as pltpu


def _attention_kernel(x_ref, wqkv_ref, wout_ref, bout_ref, o_ref,
                      *, heads, dim_head, n, bt):
    # One grid step == `bt` batch elements (bt*n rows).
    x = x_ref[...]                    # (bt*n, dim)
    wqkv = wqkv_ref[...]              # (dim, 3*inner)   (Q columns pre-scaled)
    wout = wout_ref[...]              # (inner, dim)
    bout = bout_ref[...]              # (1, dim)

    rows = bt * n
    dim = x.shape[1]
    inner = heads * dim_head

    # Fused QKV projection for the whole row tile (to_qkv has no bias).
    qkv = jnp.dot(x, wqkv, preferred_element_type=jnp.float32)    # (rows, 3*inner)
    # Cheap leading-dim split (no lane re-layout) so attention is per-batch.
    qkv3 = qkv.reshape(bt, n, 3 * inner)

    # Per-head accumulation of the output projection; replaces the
    # 'h n d -> n (h d)' rearrange + single big matmul.
    y = jnp.zeros((rows, dim), dtype=jnp.float32)

    # TODO(synk): mask path (masked_fill_ with -finfo.max) not implemented; forward uses mask=None.
    for h in range(heads):
        lo = h * dim_head
        q_h = qkv3[:, :, lo:lo + dim_head]                          # (bt, n, d), already scaled
        k_h = qkv3[:, :, inner + lo:inner + lo + dim_head]          # (bt, n, d)
        v_h = qkv3[:, :, 2 * inner + lo:2 * inner + lo + dim_head]  # (bt, n, d)

        # dots = einsum('bid,bjd->bij') -- contraction on the last axes,
        # no explicit transpose of k is materialised.
        dots = lax.dot_general(
            q_h, k_h,
            dimension_numbers=(((2,), (2,)), ((0,), (0,))),
            preferred_element_type=jnp.float32)                     # (bt, n, n)

        # Numerically stable softmax numerator; normalisation folded into the
        # PV result below (n x d vs n x n multiplies).
        m = jnp.max(dots, axis=-1, keepdims=True)
        e = jnp.exp(dots - m)
        l = jnp.sum(e, axis=-1, keepdims=True)

        # out_h = einsum('bij,bjd->bid') / l
        out_h = lax.dot_general(
            e, v_h,
            dimension_numbers=(((2,), (1,)), ((0,), (0,))),
            preferred_element_type=jnp.float32)                     # (bt, n, d)
        out_h = out_h * pl.reciprocal(l, approx=True)

        # Accumulate this head's slice of the output projection:
        #   y += out_h @ W_out[h*d:(h+1)*d, :]
        y = y + jnp.dot(out_h.reshape(rows, dim_head),
                        wout[lo:lo + dim_head, :],
                        preferred_element_type=jnp.float32)

    # Output projection bias; Dropout is identity in eval mode.
    o_ref[...] = (y + bout).astype(o_ref.dtype)


def attention_forward(x, w_qkv, w_out, b_out, *, heads, dim_head,
                      block_rows_target=256):
    """x: (b, n, dim); w_qkv: (dim, 3*heads*dim_head); w_out: (heads*dim_head, dim)."""
    b, n, dim = x.shape
    inner = heads * dim_head
    scale = float(dim_head) ** -0.5

    # Fold the softmax scale into the Q columns of the QKV weight (host-side, free).
    w_qkv_scaled = w_qkv.at[:, :inner].multiply(scale)

    # Pick the batch tile so each grid step carries ~block_rows_target rows
    # (MXU occupancy + amortised per-step overhead), and it divides b evenly.
    bt = max(1, min(b, block_rows_target // max(n, 1)))
    while b % bt:
        bt -= 1

    # Flatten tokens: projections see a tall (b*n, dim) operand and the
    # output store is lane-dense on the full `dim` axis.
    x2d = x.reshape(b * n, dim)
    bout2d = b_out.reshape(1, dim)

    kernel = functools.partial(_attention_kernel,
                               heads=heads, dim_head=dim_head, n=n, bt=bt)

    y2d = pl.pallas_call(
        kernel,
        out_shape=jax.ShapeDtypeStruct((b * n, dim), x.dtype),
        grid_spec=pltpu.PrefetchScalarGridSpec(
            num_scalar_prefetch=0,
            grid=(b // bt,),
            in_specs=[
                pl.BlockSpec((bt * n, dim), lambda i: (i, 0)),   # row tile of x
                pl.BlockSpec(w_qkv.shape, lambda i: (0, 0)),     # full qkv weight (resident)
                pl.BlockSpec(w_out.shape, lambda i: (0, 0)),     # full out weight (resident)
                pl.BlockSpec((1, dim), lambda i: (0, 0)),        # out bias
            ],
            out_specs=pl.BlockSpec((bt * n, dim), lambda i: (i, 0)),
        ),
        compiler_params=pltpu.CompilerParams(
            dimension_semantics=("parallel",)),
    )(x2d, w_qkv_scaled, w_out, bout2d)

    return y2d.reshape(b, n, dim)


def attention_reference(x, w_qkv, w_out, b_out, *, heads, dim_head):
    b, n, dim = x.shape
    inner = heads * dim_head
    scale = float(dim_head) ** -0.5
    qkv = x @ w_qkv                                   # (b, n, 3*inner)
    q, k, v = jnp.split(qkv, 3, axis=-1)

    def to_heads(t):
        return t.reshape(b, n, heads, dim_head).transpose(0, 2, 1, 3)

    q, k, v = map(to_heads, (q, k, v))
    dots = jnp.einsum('bhid,bhjd->bhij', q, k) * scale
    attn = jax.nn.softmax(dots, axis=-1)
    out = jnp.einsum('bhij,bhjd->bhid', attn, v)
    out = out.transpose(0, 2, 1, 3).reshape(b, n, inner)
    return out @ w_out + b_out[None, None, :]


if __name__ == "__main__":
    # Small shapes consistent with the module.
    B, N, DIM = 2, 8, 32
    HEADS, DIM_HEAD = 4, 8
    INNER = HEADS * DIM_HEAD

    key = jax.random.PRNGKey(0)
    kx, kw1, kw2, kb = jax.random.split(key, 4)

    x = jax.random.normal(kx, (B, N, DIM), dtype=jnp.float32)

    # Deterministic parameter init (kaiming-uniform-ish scale), stored as (in, out).
    w_qkv = jax.random.uniform(kw1, (DIM, 3 * INNER), dtype=jnp.float32,
                               minval=-1.0, maxval=1.0) / (DIM ** 0.5)
    w_out = jax.random.uniform(kw2, (INNER, DIM), dtype=jnp.float32,
                               minval=-1.0, maxval=1.0) / (INNER ** 0.5)
    b_out = jax.random.uniform(kb, (DIM,), dtype=jnp.float32,
                               minval=-1.0, maxval=1.0) / (INNER ** 0.5)

    y = attention_forward(x, w_qkv, w_out, b_out, heads=HEADS, dim_head=DIM_HEAD)
    y = jax.block_until_ready(y)

    y_ref = attention_reference(x, w_qkv, w_out, b_out, heads=HEADS, dim_head=DIM_HEAD)
    assert y.shape == (B, N, DIM)
    # Tolerance loosened slightly for the approx-reciprocal softmax denominator
    # (~1e-3 relative); still tight enough to catch any structural bug.
    assert jnp.allclose(y, y_ref, atol=1e-2, rtol=1e-2), "mismatch vs reference"

    print("KERNEL_OK")
</pallas_src>

<mosaic_0001>
module attributes {stable_mosaic.version = 11 : i64} {
  func.func @_attention_kernel(%arg0: i32, %arg1: memref<16x32xf32, #tpu.memory_space<vmem>>, %arg2: memref<32x96xf32, #tpu.memory_space<vmem>>, %arg3: memref<32x32xf32, #tpu.memory_space<vmem>>, %arg4: memref<1x32xf32, #tpu.memory_space<vmem>>, %arg5: memref<16x32xf32, #tpu.memory_space<vmem>>) attributes {dimension_semantics = [#tpu.dimension_semantics<parallel>], iteration_bounds = array<i64: 1>, scalar_prefetch = 0 : i64, scratch_operands = 0 : i64, tpu.core_type = #tpu.core_type<tc>, window_params = [{transform_indices = @transform_0, window_bounds = array<i64: 16, 32>}, {pipeline_mode = #tpu.pipeline_mode<synchronous>, transform_indices = @transform_1, window_bounds = array<i64: 32, 96>}, {pipeline_mode = #tpu.pipeline_mode<synchronous>, transform_indices = @transform_2, window_bounds = array<i64: 32, 32>}, {pipeline_mode = #tpu.pipeline_mode<synchronous>, transform_indices = @transform_3, window_bounds = array<i64: 1, 32>}, {transform_indices = @transform_4, window_bounds = array<i64: 16, 32>}]} {
    %c0 = arith.constant 0 : index
    %c0_0 = arith.constant 0 : index
    %0 = vector.load %arg1[%c0, %c0_0] : memref<16x32xf32, #tpu.memory_space<vmem>>, vector<16x32xf32>
    %c0_1 = arith.constant 0 : index
    %c0_2 = arith.constant 0 : index
    %1 = vector.load %arg2[%c0_1, %c0_2] : memref<32x96xf32, #tpu.memory_space<vmem>>, vector<32x96xf32>
    %c0_3 = arith.constant 0 : index
    %c0_4 = arith.constant 0 : index
    %2 = vector.load %arg3[%c0_3, %c0_4] : memref<32x32xf32, #tpu.memory_space<vmem>>, vector<32x32xf32>
    %c0_5 = arith.constant 0 : index
    %c0_6 = arith.constant 0 : index
    %3 = vector.load %arg4[%c0_5, %c0_6] : memref<1x32xf32, #tpu.memory_space<vmem>>, vector<1x32xf32>
    %cst = arith.constant dense<0.000000e+00> : vector<16x96xf32>
    %4 = tpu.matmul %0, %1, %cst {dimension_numbers = #tpu.dot_dimension_numbers<[1], [0], [0], [1], [0, 0, 1, 1], [], []>} : vector<16x32xf32>, vector<32x96xf32>, vector<16x96xf32> -> vector<16x96xf32>
    %5 = vector.shape_cast %4 : vector<16x96xf32> to vector<2x8x96xf32>
    %cst_7 = arith.constant 0.000000e+00 : f32
    %6 = vector.broadcast %cst_7 : f32 to vector<16x32xf32>
    %7 = vector.extract_strided_slice %5 {offsets = [0, 0, 0], sizes = [2, 8, 8], strides = [1, 1, 1]} : vector<2x8x96xf32> to vector<2x8x8xf32>
    %8 = vector.extract_strided_slice %5 {offsets = [0, 0, 32], sizes = [2, 8, 8], strides = [1, 1, 1]} : vector<2x8x96xf32> to vector<2x8x8xf32>
    %9 = vector.extract_strided_slice %5 {offsets = [0, 0, 64], sizes = [2, 8, 8], strides = [1, 1, 1]} : vector<2x8x96xf32> to vector<2x8x8xf32>
    %cst_8 = arith.constant dense<0.000000e+00> : vector<2x8x8xf32>
    %10 = tpu.matmul %7, %8, %cst_8 {dimension_numbers = #tpu.dot_dimension_numbers<[2], [2], [1], [1], [0, 0, 0, 1, 1, 1], [0], [0]>} : vector<2x8x8xf32>, vector<2x8x8xf32>, vector<2x8x8xf32> -> vector<2x8x8xf32>
    %cst_9 = arith.constant dense<0xFF800000> : vector<2x8xf32>
    %11 = vector.multi_reduction <maximumf>, %10, %cst_9 [2] : vector<2x8x8xf32> to vector<2x8xf32>
    %12 = vector.shape_cast %11 : vector<2x8xf32> to vector<2x8x1xf32>
    %13 = vector.broadcast %12 : vector<2x8x1xf32> to vector<2x8x8xf32>
    %14 = arith.subf %10, %13 : vector<2x8x8xf32>
    %15 = math.exp %14 : vector<2x8x8xf32>
    %cst_10 = arith.constant dense<0.000000e+00> : vector<2x8xf32>
    %16 = vector.multi_reduction <add>, %15, %cst_10 [2] : vector<2x8x8xf32> to vector<2x8xf32>
    %17 = vector.shape_cast %16 : vector<2x8xf32> to vector<2x8x1xf32>
    %cst_11 = arith.constant dense<0.000000e+00> : vector<2x8x8xf32>
    %18 = tpu.matmul %15, %9, %cst_11 {dimension_numbers = #tpu.dot_dimension_numbers<[2], [1], [1], [2], [0, 0, 0, 1, 1, 2], [0], [0]>} : vector<2x8x8xf32>, vector<2x8x8xf32>, vector<2x8x8xf32> -> vector<2x8x8xf32>
    %19 = tpu.reciprocal %17 {approx = true} : vector<2x8x1xf32> -> vector<2x8x1xf32>
    %20 = vector.broadcast %19 : vector<2x8x1xf32> to vector<2x8x8xf32>
    %21 = arith.mulf %18, %20 : vector<2x8x8xf32>
    %22 = vector.shape_cast %21 : vector<2x8x8xf32> to vector<16x8xf32>
    %23 = vector.extract_strided_slice %2 {offsets = [0, 0], sizes = [8, 32], strides = [1, 1]} : vector<32x32xf32> to vector<8x32xf32>
    %cst_12 = arith.constant dense<0.000000e+00> : vector<16x32xf32>
    %24 = tpu.matmul %22, %23, %cst_12 {dimension_numbers = #tpu.dot_dimension_numbers<[1], [0], [0], [1], [0, 0, 1, 1], [], []>} : vector<16x8xf32>, vector<8x32xf32>, vector<16x32xf32> -> vector<16x32xf32>
    %25 = arith.addf %6, %24 : vector<16x32xf32>
    %26 = vector.extract_strided_slice %5 {offsets = [0, 0, 8], sizes = [2, 8, 8], strides = [1, 1, 1]} : vector<2x8x96xf32> to vector<2x8x8xf32>
    %27 = vector.extract_strided_slice %5 {offsets = [0, 0, 40], sizes = [2, 8, 8], strides = [1, 1, 1]} : vector<2x8x96xf32> to vector<2x8x8xf32>
    %28 = vector.extract_strided_slice %5 {offsets = [0, 0, 72], sizes = [2, 8, 8], strides = [1, 1, 1]} : vector<2x8x96xf32> to vector<2x8x8xf32>
    %cst_13 = arith.constant dense<0.000000e+00> : vector<2x8x8xf32>
    %29 = tpu.matmul %26, %27, %cst_13 {dimension_numbers = #tpu.dot_dimension_numbers<[2], [2], [1], [1], [0, 0, 0, 1, 1, 1], [0], [0]>} : vector<2x8x8xf32>, vector<2x8x8xf32>, vector<2x8x8xf32> -> vector<2x8x8xf32>
    %cst_14 = arith.constant dense<0xFF800000> : vector<2x8xf32>
    %30 = vector.multi_reduction <maximumf>, %29, %cst_14 [2] : vector<2x8x8xf32> to vector<2x8xf32>
    %31 = vector.shape_cast %30 : vector<2x8xf32> to vector<2x8x1xf32>
    %32 = vector.broadcast %31 : vector<2x8x1xf32> to vector<2x8x8xf32>
    %33 = arith.subf %29, %32 : vector<2x8x8xf32>
    %34 = math.exp %33 : vector<2x8x8xf32>
    %cst_15 = arith.constant dense<0.000000e+00> : vector<2x8xf32>
    %35 = vector.multi_reduction <add>, %34, %cst_15 [2] : vector<2x8x8xf32> to vector<2x8xf32>
    %36 = vector.shape_cast %35 : vector<2x8xf32> to vector<2x8x1xf32>
    %cst_16 = arith.constant dense<0.000000e+00> : vector<2x8x8xf32>
    %37 = tpu.matmul %34, %28, %cst_16 {dimension_numbers = #tpu.dot_dimension_numbers<[2], [1], [1], [2], [0, 0, 0, 1, 1, 2], [0], [0]>} : vector<2x8x8xf32>, vector<2x8x8xf32>, vector<2x8x8xf32> -> vector<2x8x8xf32>
    %38 = tpu.reciprocal %36 {approx = true} : vector<2x8x1xf32> -> vector<2x8x1xf32>
    %39 = vector.broadcast %38 : vector<2x8x1xf32> to vector<2x8x8xf32>
    %40 = arith.mulf %37, %39 : vector<2x8x8xf32>
    %41 = vector.shape_cast %40 : vector<2x8x8xf32> to vector<16x8xf32>
    %42 = vector.extract_strided_slice %2 {offsets = [8, 0], sizes = [8, 32], strides = [1, 1]} : vector<32x32xf32> to vector<8x32xf32>
    %cst_17 = arith.constant dense<0.000000e+00> : vector<16x32xf32>
    %43 = tpu.matmul %41, %42, %cst_17 {dimension_numbers = #tpu.dot_dimension_numbers<[1], [0], [0], [1], [0, 0, 1, 1], [], []>} : vector<16x8xf32>, vector<8x32xf32>, vector<16x32xf32> -> vector<16x32xf32>
    %44 = arith.addf %25, %43 : vector<16x32xf32>
    %45 = vector.extract_strided_slice %5 {offsets = [0, 0, 16], sizes = [2, 8, 8], strides = [1, 1, 1]} : vector<2x8x96xf32> to vector<2x8x8xf32>
    %46 = vector.extract_strided_slice %5 {offsets = [0, 0, 48], sizes = [2, 8, 8], strides = [1, 1, 1]} : vector<2x8x96xf32> to vector<2x8x8xf32>
    %47 = vector.extract_strided_slice %5 {offsets = [0, 0, 80], sizes = [2, 8, 8], strides = [1, 1, 1]} : vector<2x8x96xf32> to vector<2x8x8xf32>
    %cst_18 = arith.constant dense<0.000000e+00> : vector<2x8x8xf32>
    %48 = tpu.matmul %45, %46, %cst_18 {dimension_numbers = #tpu.dot_dimension_numbers<[2], [2], [1], [1], [0, 0, 0, 1, 1, 1], [0], [0]>} : vector<2x8x8xf32>, vector<2x8x8xf32>, vector<2x8x8xf32> -> vector<2x8x8xf32>
    %cst_19 = arith.constant dense<0xFF800000> : vector<2x8xf32>
    %49 = vector.multi_reduction <maximumf>, %48, %cst_19 [2] : vector<2x8x8xf32> to vector<2x8xf32>
    %50 = vector.shape_cast %49 : vector<2x8xf32> to vector<2x8x1xf32>
    %51 = vector.broadcast %50 : vector<2x8x1xf32> to vector<2x8x8xf32>
    %52 = arith.subf %48, %51 : vector<2x8x8xf32>
    %53 = math.exp %52 : vector<2x8x8xf32>
    %cst_20 = arith.constant dense<0.000000e+00> : vector<2x8xf32>
    %54 = vector.multi_reduction <add>, %53, %cst_20 [2] : vector<2x8x8xf32> to vector<2x8xf32>
    %55 = vector.shape_cast %54 : vector<2x8xf32> to vector<2x8x1xf32>
    %cst_21 = arith.constant dense<0.000000e+00> : vector<2x8x8xf32>
    %56 = tpu.matmul %53, %47, %cst_21 {dimension_numbers = #tpu.dot_dimension_numbers<[2], [1], [1], [2], [0, 0, 0, 1, 1, 2], [0], [0]>} : vector<2x8x8xf32>, vector<2x8x8xf32>, vector<2x8x8xf32> -> vector<2x8x8xf32>
    %57 = tpu.reciprocal %55 {approx = true} : vector<2x8x1xf32> -> vector<2x8x1xf32>
    %58 = vector.broadcast %57 : vector<2x8x1xf32> to vector<2x8x8xf32>
    %59 = arith.mulf %56, %58 : vector<2x8x8xf32>
    %60 = vector.shape_cast %59 : vector<2x8x8xf32> to vector<16x8xf32>
    %61 = vector.extract_strided_slice %2 {offsets = [16, 0], sizes = [8, 32], strides = [1, 1]} : vector<32x32xf32> to vector<8x32xf32>
    %cst_22 = arith.constant dense<0.000000e+00> : vector<16x32xf32>
    %62 = tpu.matmul %60, %61, %cst_22 {dimension_numbers = #tpu.dot_dimension_numbers<[1], [0], [0], [1], [0, 0, 1, 1], [], []>} : vector<16x8xf32>, vector<8x32xf32>, vector<16x32xf32> -> vector<16x32xf32>
    %63 = arith.addf %44, %62 : vector<16x32xf32>
    %64 = vector.extract_strided_slice %5 {offsets = [0, 0, 24], sizes = [2, 8, 8], strides = [1, 1, 1]} : vector<2x8x96xf32> to vector<2x8x8xf32>
    %65 = vector.extract_strided_slice %5 {offsets = [0, 0, 56], sizes = [2, 8, 8], strides = [1, 1, 1]} : vector<2x8x96xf32> to vector<2x8x8xf32>
    %66 = vector.extract_strided_slice %5 {offsets = [0, 0, 88], sizes = [2, 8, 8], strides = [1, 1, 1]} : vector<2x8x96xf32> to vector<2x8x8xf32>
    %cst_23 = arith.constant dense<0.000000e+00> : vector<2x8x8xf32>
    %67 = tpu.matmul %64, %65, %cst_23 {dimension_numbers = #tpu.dot_dimension_numbers<[2], [2], [1], [1], [0, 0, 0, 1, 1, 1], [0], [0]>} : vector<2x8x8xf32>, vector<2x8x8xf32>, vector<2x8x8xf32> -> vector<2x8x8xf32>
    %cst_24 = arith.constant dense<0xFF800000> : vector<2x8xf32>
    %68 = vector.multi_reduction <maximumf>, %67, %cst_24 [2] : vector<2x8x8xf32> to vector<2x8xf32>
    %69 = vector.shape_cast %68 : vector<2x8xf32> to vector<2x8x1xf32>
    %70 = vector.broadcast %69 : vector<2x8x1xf32> to vector<2x8x8xf32>
    %71 = arith.subf %67, %70 : vector<2x8x8xf32>
    %72 = math.exp %71 : vector<2x8x8xf32>
    %cst_25 = arith.constant dense<0.000000e+00> : vector<2x8xf32>
    %73 = vector.multi_reduction <add>, %72, %cst_25 [2] : vector<2x8x8xf32> to vector<2x8xf32>
    %74 = vector.shape_cast %73 : vector<2x8xf32> to vector<2x8x1xf32>
    %cst_26 = arith.constant dense<0.000000e+00> : vector<2x8x8xf32>
    %75 = tpu.matmul %72, %66, %cst_26 {dimension_numbers = #tpu.dot_dimension_numbers<[2], [1], [1], [2], [0, 0, 0, 1, 1, 2], [0], [0]>} : vector<2x8x8xf32>, vector<2x8x8xf32>, vector<2x8x8xf32> -> vector<2x8x8xf32>
    %76 = tpu.reciprocal %74 {approx = true} : vector<2x8x1xf32> -> vector<2x8x1xf32>
    %77 = vector.broadcast %76 : vector<2x8x1xf32> to vector<2x8x8xf32>
    %78 = arith.mulf %75, %77 : vector<2x8x8xf32>
    %79 = vector.shape_cast %78 : vector<2x8x8xf32> to vector<16x8xf32>
    %80 = vector.extract_strided_slice %2 {offsets = [24, 0], sizes = [8, 32], strides = [1, 1]} : vector<32x32xf32> to vector<8x32xf32>
    %cst_27 = arith.constant dense<0.000000e+00> : vector<16x32xf32>
    %81 = tpu.matmul %79, %80, %cst_27 {dimension_numbers = #tpu.dot_dimension_numbers<[1], [0], [0], [1], [0, 0, 1, 1], [], []>} : vector<16x8xf32>, vector<8x32xf32>, vector<16x32xf32> -> vector<16x32xf32>
    %82 = arith.addf %63, %81 : vector<16x32xf32>
    %83 = vector.broadcast %3 : vector<1x32xf32> to vector<16x32xf32>
    %84 = arith.addf %82, %83 : vector<16x32xf32>
    %c0_28 = arith.constant 0 : index
    %c0_29 = arith.constant 0 : index
    %85 = vector.load %arg5[%c0_28, %c0_29] : memref<16x32xf32, #tpu.memory_space<vmem>>, vector<16x32xf32>
    tpu.vector_store %arg5[%c0_28, %c0_29], %84 {strides = array<i32>} : memref<16x32xf32, #tpu.memory_space<vmem>>, vector<16x32xf32>,
    return
  }
  func.func @transform_0(%arg0: i32) -> (i32, i32) {
    %c0_i32 = arith.constant 0 : i32
    %c0_i32_0 = arith.constant 0 : i32
    return %arg0, %c0_i32 : i32, i32
  }
  func.func @transform_1(%arg0: i32) -> (i32, i32) {
    %c0_i32 = arith.constant 0 : i32
    %c0_i32_0 = arith.constant 0 : i32
    %c0_i32_1 = arith.constant 0 : i32
    return %c0_i32, %c0_i32_0 : i32, i32
  }
  func.func @transform_2(%arg0: i32) -> (i32, i32) {
    %c0_i32 = arith.constant 0 : i32
    %c0_i32_0 = arith.constant 0 : i32
    %c0_i32_1 = arith.constant 0 : i32
    return %c0_i32, %c0_i32_0 : i32, i32
  }
  func.func @transform_3(%arg0: i32) -> (i32, i32) {
    %c0_i32 = arith.constant 0 : i32
    %c0_i32_0 = arith.constant 0 : i32
    %c0_i32_1 = arith.constant 0 : i32
    return %c0_i32, %c0_i32_0 : i32, i32
  }
  func.func @transform_4(%arg0: i32) -> (i32, i32) {
    %c0_i32 = arith.constant 0 : i32
    %c0_i32_0 = arith.constant 0 : i32
    return %arg0, %c0_i32 : i32, i32
  }
}

</mosaic_0001>

<llo_original>
// kernel: tpu_custom_call.1
$region0: #{tpu_custom_call.1}
  #allocation0 [shape = 'u32[]', space=smem, size = 0x4, offset = 0x4, fixed_abs, tag = 'smem constant byte address 0x4 - core index']
  #allocation1 [shape = 'u32[144,128]{1,0:T(1,128)}', space=vmem, size = 0x12000, scoped, tag = 'internal scratch']
  %s0 = inlined_call_operand.hbm [shape: f32[16,32], index: 0, kind: input, shape index: {}]
  %s1 = inlined_call_operand.hbm [shape: f32[32,96], index: 1, kind: input, shape index: {}]
  %s2 = inlined_call_operand.hbm [shape: f32[32,32], index: 2, kind: input, shape index: {}]
  %s3 = inlined_call_operand.vmem [shape: f32[1,32], index: 3, kind: input, shape index: {}]
  %s4 = inlined_call_operand.hbm [shape: f32[16,32], index: 4, kind: output, shape index: {}]
  %s5 = sld [smem:[#allocation0]]
  $region38: #{tpu_custom_call.1} parent=0
    _
  %s7 = ssub.s32 1, %s5
  %s8 = scalar_select 0, %s7, %s5
  $region1: #{tpu_custom_call.1} parent=0
    #allocation2 [shape = 'u8[8192]{0}', space=vmem, size = 0x2000, scoped, tag = 'input window, operand 0, single buffered']
    #allocation3 [shape = 's32[1]{0}', space=sflag, size = 0x4, scoped, tag = 'scoped memory for tpu_custom_call.1']
    #allocation4 [shape = 's32[1]{0}', space=sflag, size = 0x4, scoped, tag = 'scoped memory for tpu_custom_call.1']
    #allocation5 [shape = 'u8[16384]{0}', space=vmem, size = 0x4000, scoped, tag = 'input window, operand 1, single buffered']
    #allocation6 [shape = 's32[1]{0}', space=sflag, size = 0x4, scoped, tag = 'scoped memory for tpu_custom_call.1']
    #allocation7 [shape = 'u8[16384]{0}', space=vmem, size = 0x4000, scoped, tag = 'input window, operand 2, single buffered']
    #allocation8 [shape = 'u8[8192]{0}', space=vmem, size = 0x2000, scoped, tag = 'output window, operand 0, single buffered']
    %9 = vsyncpa [#allocation3], 0
    %10 = vsyncpa [#allocation6], 0
    %11 = vsyncpa [#allocation4], 0
    // Predicated region
    $region2: #{tpu_custom_call.1} parent=1 // pred_check
      _
    $region3: #{tpu_custom_call.1} parent=1 // pred_check_branch
      %13 = sbr.rel (0) target = $region5
    $region4: #{tpu_custom_call.1} parent=1 // pred_region
      %s15 = ssub.s32 256, 256
      %16 = vsyncadd [#allocation3], %s15
      %s17 = sshll.u32 [#allocation2], 4
      %s18 = int_to_ptr.vmem [resolvable:$true] %s17
      %23 = dma.hbm_to_vmem [thread:$0]  %s0, 256, %s18, [#allocation3], 128, 128, 8
    $region5: #{tpu_custom_call.1} parent=1 // pred_fallthru
      _
    // Predicated region
    $region6: #{tpu_custom_call.1} parent=1 // pred_check
      _
    $region7: #{tpu_custom_call.1} parent=1 // pred_check_branch
      %25 = sbr.rel (0) target = $region9
    $region8: #{tpu_custom_call.1} parent=1 // pred_region
      %s27 = ssub.s32 512, 512
      %28 = vsyncadd [#allocation6], %s27
      %s29 = sshll.u32 [#allocation5], 4
      %s30 = int_to_ptr.vmem [resolvable:$true] %s29
      %35 = dma.hbm_to_vmem [thread:$0]  %s1, 512, %s30, [#allocation6], 128, 128, 8
    $region9: #{tpu_custom_call.1} parent=1 // pred_fallthru
      _
    // Predicated region
    $region10: #{tpu_custom_call.1} parent=1 // pred_check
      _
    $region11: #{tpu_custom_call.1} parent=1 // pred_check_branch
      %37 = sbr.rel (0) target = $region13
    $region12: #{tpu_custom_call.1} parent=1 // pred_region
      %s39 = ssub.s32 512, 512
      %40 = vsyncadd [#allocation6], %s39
      %s41 = sshll.u32 [#allocation7], 4
      %s42 = int_to_ptr.vmem [resolvable:$true] %s41
      %47 = dma.hbm_to_vmem [thread:$0]  %s2, 512, %s42, [#allocation6], 128, 128, 8
    $region13: #{tpu_custom_call.1} parent=1 // pred_fallthru
      _
    // Predicated region
    $region14: #{tpu_custom_call.1} parent=1 // pred_check
      _
    $region15: #{tpu_custom_call.1} parent=1 // pred_check_branch
      %49 = sbr.rel (0) target = $region17
    $region16: #{tpu_custom_call.1} parent=1 // pred_region
      _
    $region17: #{tpu_custom_call.1} parent=1 // pred_fallthru
      _
    // Predicated region
    $region18: #{tpu_custom_call.1} parent=1 // pred_check
      _
    $region19: #{tpu_custom_call.1} parent=1 // pred_check_branch
      %51 = sbr.rel (0) target = $region21
    $region20: #{tpu_custom_call.1} parent=1 // pred_region
      %52 = dma.done [#allocation3], 256
    $region21: #{tpu_custom_call.1} parent=1 // pred_fallthru
      _
    // Predicated region
    $region22: #{tpu_custom_call.1} parent=1 // pred_check
      _
    $region23: #{tpu_custom_call.1} parent=1 // pred_check_branch
      %54 = sbr.rel (0) target = $region25
    $region24: #{tpu_custom_call.1} parent=1 // pred_region
      %55 = dma.done [#allocation6], 512
    $region25: #{tpu_custom_call.1} parent=1 // pred_fallthru
      _
    // Predicated region
    $region26: #{tpu_custom_call.1} parent=1 // pred_check
      _
    $region27: #{tpu_custom_call.1} parent=1 // pred_check_branch
      %57 = sbr.rel (0) target = $region29
    $region28: #{tpu_custom_call.1} parent=1 // pred_region
      %58 = dma.done [#allocation6], 512
    $region29: #{tpu_custom_call.1} parent=1 // pred_fallthru
      _
    %v59 = vld [vmem:[#allocation2] sm:$0xff]
    %v60 = vld [vmem:[#allocation2 + $0x8] sm:$0xff]
    %v61 = vld [vmem:[#allocation5] sm:$0xff]
    %v62 = vld [vmem:[#allocation5 + $0x8] sm:$0xff]
    %v63 = vld [vmem:[#allocation5 + $0x10] sm:$0xff]
    %v64 = vld [vmem:[#allocation5 + $0x18] sm:$0xff]
    %v65 = vld [vmem:[#allocation7] sm:$0xff]
    %v66 = vld [vmem:[#allocation7 + $0x8] sm:$0xff]
    %v67 = vld [vmem:[#allocation7 + $0x10] sm:$0xff]
    %v68 = vld [vmem:[#allocation7 + $0x18] sm:$0xff]
    %v69 = vld [vmem:[%s3] sm:$0x1]
    %vm70 = vcmask 261120
    %v72 = vsel %vm70, %v59, 0
    %v75 = vsel %vm70, %v60, 0
    %77 = vmatprep.subr.mxu0 0.0
    %78 = vmatpush1.msra.mxu0 %v61
    %79 = vmatprep.subr.mxu0 0.0
    %80 = vmatpush1.msra.mxu0 %v62
    %81 = vmatprep.subr.mxu0 0.0
    %82 = vmatpush1.msra.mxu0 %v63
    %83 = vmatprep.subr.mxu0 0.0
    %84 = vmatpush1.msra.mxu0 %v64
    %85 = vmatprep.subr.mxu0 0.0
    %86 = vmatpush1.msra.mxu0 0.0
    %87 = vmatprep.subr.mxu0 0.0
    %88 = vmatpush1.msra.mxu0 0.0
    %89 = vmatprep.subr.mxu0 0.0
    %90 = vmatpush1.msra.mxu0 0.0
    %91 = vmatprep.subr.mxu0 0.0
    %92 = vmatpush1.msra.mxu0 0.0
    %93 = vmatprep.subr.mxu0 0.0
    %94 = vmatpush1.msra.mxu0 0.0
    %95 = vmatprep.subr.mxu0 0.0
    %96 = vmatpush1.msra.mxu0 0.0
    %97 = vmatprep.subr.mxu0 0.0
    %98 = vmatpush1.msra.mxu0 0.0
    %99 = vmatprep.subr.mxu0 0.0
    %100 = vmatpush1.msra.mxu0 0.0
    %101 = vmatprep.subr.mxu0 0.0
    %102 = vmatpush1.msra.mxu0 0.0
    %103 = vmatprep.subr.mxu0 0.0
    %104 = vmatpush1.msra.mxu0 0.0
    %105 = vmatprep.subr.mxu0 0.0
    %106 = vmatpush1.msra.mxu0 0.0
    %107 = vmatprep.subr.mxu0 0.0
    %108 = vmatpush1.msra.mxu0 0.0
    %109 = vmatprep.subr.mxu0 0.0
    %110 = vmatpush1.msra.mxu0 0.0
    %111 = vmatprep.subr.mxu0 0.0
    %112 = vmatpush1.msra.mxu0 0.0
    %113 = vmatprep.subr.mxu0 0.0
    %114 = vmatpush1.msra.mxu0 0.0
    %115 = vmatprep.subr.mxu0 0.0
    %116 = vmatpush1.msra.mxu0 0.0
    %117 = vmatprep.subr.mxu0 0.0
    %118 = vmatpush1.msra.mxu0 0.0
    %119 = vmatprep.subr.mxu0 0.0
    %120 = vmatpush1.msra.mxu0 0.0
    %121 = vmatprep.subr.mxu0 0.0
    %122 = vmatpush1.msra.mxu0 0.0
    %123 = vmatprep.subr.mxu0 0.0
    %124 = vmatpush1.msra.mxu0 0.0
    %125 = vmatprep.subr.mxu0 0.0
    %126 = vmatpush1.msra.mxu0 0.0
    %127 = vmatprep.subr.mxu0 0.0
    %128 = vmatpush1.msra.mxu0 0.0
    %129 = vmatprep.subr.mxu0 0.0
    %130 = vmatpush1.msra.mxu0 0.0
    %131 = vmatprep.subr.mxu0 0.0
    %132 = vmatpush1.msra.mxu0 0.0
    %133 = vmatprep.subr.mxu0 0.0
    %134 = vmatpush1.msra.mxu0 0.0
    %135 = vmatprep.subr.mxu0 0.0
    %136 = vmatpush1.msra.mxu0 0.0
    %137 = vmatprep.subr.mxu0 0.0
    %138 = vmatpush1.msra.mxu0 0.0
    %139 = vmatprep.subr.mxu0 0.0
    %140 = vmatpush1.msra.mxu0 0.0
    %141 = vmatprep.mubr.f32.mxu0 0.0
    %142 = vmatmul.mubr.f32.gmra.mrb[0].mxu0 %v72
    %v143 = vpop.f32.mrb[0].mxu0
    %v144 = vadd.f32 0.0, %v143
    %v145 = vpop.f32.mrb[0].mxu0
    %146 = vmatprep.mubr.f32.mxu0 0.0
    %147 = vmatmul.mubr.f32.gmra.mrb[0].mxu0 %v75
    %v148 = vpop.f32.mrb[0].mxu0
    %v149 = vadd.f32 0.0, %v148
    %v150 = vpop.f32.mrb[0].mxu0
    %151 = vdwg.mxu0
    %153 = vrot.lane.b32.xlu0 %v144, 96
    %v154 = vpop.permute.xlu0 %153
    %vm155 = vcmask 64512
    %v156 = vsel %vm155, %v144, 0
    %v158 = vsel %vm155, %v154, 0
    %160 = vmatprep.subr.mxu0 0.0
    %161 = vmatpush1.xpose.msra.mxu0 %v158
    %162 = vmatprep.subr.mxu0 0.0
    %163 = vmatpush1.xpose.msra.mxu0 0.0
    %164 = vmatprep.subr.mxu0 0.0
    %165 = vmatpush1.xpose.msra.mxu0 0.0
    %166 = vmatprep.subr.mxu0 0.0
    %167 = vmatpush1.xpose.msra.mxu0 0.0
    %168 = vmatprep.subr.mxu0 0.0
    %169 = vmatpush1.xpose.msra.mxu0 0.0
    %170 = vmatprep.subr.mxu0 0.0
    %171 = vmatpush1.xpose.msra.mxu0 0.0
    %172 = vmatprep.subr.mxu0 0.0
    %173 = vmatpush1.xpose.msra.mxu0 0.0
    %174 = vmatprep.subr.mxu0 0.0
    %175 = vmatpush1.xpose.msra.mxu0 0.0
    %176 = vmatprep.subr.mxu0 0.0
    %177 = vmatpush1.xpose.msra.mxu0 0.0
    %178 = vmatprep.subr.mxu0 0.0
    %179 = vmatpush1.xpose.msra.mxu0 0.0
    %180 = vmatprep.subr.mxu0 0.0
    %181 = vmatpush1.xpose.msra.mxu0 0.0
    %182 = vmatprep.subr.mxu0 0.0
    %183 = vmatpush1.xpose.msra.mxu0 0.0
    %184 = vmatprep.subr.mxu0 0.0
    %185 = vmatpush1.xpose.msra.mxu0 0.0
    %186 = vmatprep.subr.mxu0 0.0
    %187 = vmatpush1.xpose.msra.mxu0 0.0
    %188 = vmatprep.subr.mxu0 0.0
    %189 = vmatpush1.xpose.msra.mxu0 0.0
    %190 = vmatprep.subr.mxu0 0.0
    %191 = vmatpush1.xpose.msra.mxu0 0.0
    %192 = vmatprep.subr.mxu0 0.0
    %193 = vmatpush1.xpose.msra.mxu0 0.0
    %194 = vmatprep.subr.mxu0 0.0
    %195 = vmatpush1.xpose.msra.mxu0 0.0
    %196 = vmatprep.subr.mxu0 0.0
    %197 = vmatpush1.xpose.msra.mxu0 0.0
    %198 = vmatprep.subr.mxu0 0.0
    %199 = vmatpush1.xpose.msra.mxu0 0.0
    %200 = vmatprep.subr.mxu0 0.0
    %201 = vmatpush1.xpose.msra.mxu0 0.0
    %202 = vmatprep.subr.mxu0 0.0
    %203 = vmatpush1.xpose.msra.mxu0 0.0
    %204 = vmatprep.subr.mxu0 0.0
    %205 = vmatpush1.xpose.msra.mxu0 0.0
    %206 = vmatprep.subr.mxu0 0.0
    %207 = vmatpush1.xpose.msra.mxu0 0.0
    %208 = vmatprep.subr.mxu0 0.0
    %209 = vmatpush1.xpose.msra.mxu0 0.0
    %210 = vmatprep.subr.mxu0 0.0
    %211 = vmatpush1.xpose.msra.mxu0 0.0
    %212 = vmatprep.subr.mxu0 0.0
    %213 = vmatpush1.xpose.msra.mxu0 0.0
    %214 = vmatprep.subr.mxu0 0.0
    %215 = vmatpush1.xpose.msra.mxu0 0.0
    %216 = vmatprep.subr.mxu0 0.0
    %217 = vmatpush1.xpose.msra.mxu0 0.0
    %218 = vmatprep.subr.mxu0 0.0
    %219 = vmatpush1.xpose.msra.mxu0 0.0
    %220 = vmatprep.subr.mxu0 0.0
    %221 = vmatpush1.xpose.msra.mxu0 0.0
    %222 = vmatprep.subr.mxu0 0.0
    %223 = vmatpush1.xpose.msra.mxu0 0.0
    %224 = vmatprep.mubr.f32.mxu0 0.0
    %225 = vmatmul.mubr.f32.gmra.mrb[0].mxu0 %v156
    %v226 = vpop.f32.mrb[0].mxu0
    %v227 = vadd.f32 0.0, %v226
    %v228 = vpop.f32.mrb[0].mxu0
    %229 = vdwg.mxu0
    %231 = vrot.lane.b32.xlu0 %v149, 96
    %v232 = vpop.permute.xlu0 %231
    %v233 = vsel %vm155, %v149, 0
    %v235 = vsel %vm155, %v232, 0
    %237 = vmatprep.subr.mxu0 0.0
    %238 = vmatpush1.xpose.msra.mxu0 %v235
    %239 = vmatprep.subr.mxu0 0.0
    %240 = vmatpush1.xpose.msra.mxu0 0.0
    %241 = vmatprep.subr.mxu0 0.0
    %242 = vmatpush1.xpose.msra.mxu0 0.0
    %243 = vmatprep.subr.mxu0 0.0
    %244 = vmatpush1.xpose.msra.mxu0 0.0
    %245 = vmatprep.subr.mxu0 0.0
    %246 = vmatpush1.xpose.msra.mxu0 0.0
    %247 = vmatprep.subr.mxu0 0.0
    %248 = vmatpush1.xpose.msra.mxu0 0.0
    %249 = vmatprep.subr.mxu0 0.0
    %250 = vmatpush1.xpose.msra.mxu0 0.0
    %251 = vmatprep.subr.mxu0 0.0
    %252 = vmatpush1.xpose.msra.mxu0 0.0
    %253 = vmatprep.subr.mxu0 0.0
    %254 = vmatpush1.xpose.msra.mxu0 0.0
    %255 = vmatprep.subr.mxu0 0.0
    %256 = vmatpush1.xpose.msra.mxu0 0.0
    %257 = vmatprep.subr.mxu0 0.0
    %258 = vmatpush1.xpose.msra.mxu0 0.0
    %259 = vmatprep.subr.mxu0 0.0
    %260 = vmatpush1.xpose.msra.mxu0 0.0
    %261 = vmatprep.subr.mxu0 0.0
    %262 = vmatpush1.xpose.msra.mxu0 0.0
    %263 = vmatprep.subr.mxu0 0.0
    %264 = vmatpush1.xpose.msra.mxu0 0.0
    %265 = vmatprep.subr.mxu0 0.0
    %266 = vmatpush1.xpose.msra.mxu0 0.0
    %267 = vmatprep.subr.mxu0 0.0
    %268 = vmatpush1.xpose.msra.mxu0 0.0
    %269 = vmatprep.subr.mxu0 0.0
    %270 = vmatpush1.xpose.msra.mxu0 0.0
    %271 = vmatprep.subr.mxu0 0.0
    %272 = vmatpush1.xpose.msra.mxu0 0.0
    %273 = vmatprep.subr.mxu0 0.0
    %274 = vmatpush1.xpose.msra.mxu0 0.0
    %275 = vmatprep.subr.mxu0 0.0
    %276 = vmatpush1.xpose.msra.mxu0 0.0
    %277 = vmatprep.subr.mxu0 0.0
    %278 = vmatpush1.xpose.msra.mxu0 0.0
    %279 = vmatprep.subr.mxu0 0.0
    %280 = vmatpush1.xpose.msra.mxu0 0.0
    %281 = vmatprep.subr.mxu0 0.0
    %282 = vmatpush1.xpose.msra.mxu0 0.0
    %283 = vmatprep.subr.mxu0 0.0
    %284 = vmatpush1.xpose.msra.mxu0 0.0
    %285 = vmatprep.subr.mxu0 0.0
    %286 = vmatpush1.xpose.msra.mxu0 0.0
    %287 = vmatprep.subr.mxu0 0.0
    %288 = vmatpush1.xpose.msra.mxu0 0.0
    %289 = vmatprep.subr.mxu0 0.0
    %290 = vmatpush1.xpose.msra.mxu0 0.0
    %291 = vmatprep.subr.mxu0 0.0
    %292 = vmatpush1.xpose.msra.mxu0 0.0
    %293 = vmatprep.subr.mxu0 0.0
    %294 = vmatpush1.xpose.msra.mxu0 0.0
    %295 = vmatprep.subr.mxu0 0.0
    %296 = vmatpush1.xpose.msra.mxu0 0.0
    %297 = vmatprep.subr.mxu0 0.0
    %298 = vmatpush1.xpose.msra.mxu0 0.0
    %299 = vmatprep.subr.mxu0 0.0
    %300 = vmatpush1.xpose.msra.mxu0 0.0
    %301 = vmatprep.mubr.f32.mxu0 0.0
    %302 = vmatmul.mubr.f32.gmra.mrb[0].mxu0 %v233
    %v303 = vpop.f32.mrb[0].mxu0
    %v304 = vadd.f32 0.0, %v303
    %v305 = vpop.f32.mrb[0].mxu0
    %306 = vdwg.mxu0
    %v307 = vsel %vm155, %v227, -inf
    %308 = vmax.xlane.f32.xlu0 %v307
    %v309 = vpop.xlane.xlu0 %308
    %v310 = vsel %vm155, %v304, -inf
    %311 = vmax.xlane.f32.xlu0 %v310
    %v312 = vpop.xlane.xlu0 %311
    %v313 = vsub.f32 %v227, %v309
    %v314 = vsub.f32 %v304, %v312
    %v315 = vmul.f32 %v313, 1.442695
    %v316 = vpow.pop %v315
    %v317 = vmul.f32 %v314, 1.442695
    %v318 = vpow.pop %v317
    %v319 = vsel %vm155, %v316, 0.0
    %320 = vadd.xlane.f32.xlu0 %v319
    %v321 = vpop.xlane.xlu0 %320
    %v322 = vsel %vm155, %v318, 0.0
    %323 = vadd.xlane.f32.xlu0 %v322
    %v324 = vpop.xlane.xlu0 %323
    %325 = vrot.lane.b32.xlu0 %v144, 64
    %v326 = vpop.permute.xlu0 %325
    %v329 = vsel %vm155, %v316, 0
    %331 = vmatprep.subr.mxu0 0.0
    %332 = vmatpush1.msra.mxu0 %v326
    %333 = vmatprep.subr.mxu0 0.0
    %334 = vmatpush1.msra.mxu0 0.0
    %335 = vmatprep.subr.mxu0 0.0
    %336 = vmatpush1.msra.mxu0 0.0
    %337 = vmatprep.subr.mxu0 0.0
    %338 = vmatpush1.msra.mxu0 0.0
    %339 = vmatprep.subr.mxu0 0.0
    %340 = vmatpush1.msra.mxu0 0.0
    %341 = vmatprep.subr.mxu0 0.0
    %342 = vmatpush1.msra.mxu0 0.0
    %343 = vmatprep.subr.mxu0 0.0
    %344 = vmatpush1.msra.mxu0 0.0
    %345 = vmatprep.subr.mxu0 0.0
    %346 = vmatpush1.msra.mxu0 0.0
    %347 = vmatprep.subr.mxu0 0.0
    %348 = vmatpush1.msra.mxu0 0.0
    %349 = vmatprep.subr.mxu0 0.0
    %350 = vmatpush1.msra.mxu0 0.0
    %351 = vmatprep.subr.mxu0 0.0
    %352 = vmatpush1.msra.mxu0 0.0
    %353 = vmatprep.subr.mxu0 0.0
    %354 = vmatpush1.msra.mxu0 0.0
    %355 = vmatprep.subr.mxu0 0.0
    %356 = vmatpush1.msra.mxu0 0.0
    %357 = vmatprep.subr.mxu0 0.0
    %358 = vmatpush1.msra.mxu0 0.0
    %359 = vmatprep.subr.mxu0 0.0
    %360 = vmatpush1.msra.mxu0 0.0
    %361 = vmatprep.subr.mxu0 0.0
    %362 = vmatpush1.msra.mxu0 0.0
    %363 = vmatprep.subr.mxu0 0.0
    %364 = vmatpush1.msra.mxu0 0.0
    %365 = vmatprep.subr.mxu0 0.0
    %366 = vmatpush1.msra.mxu0 0.0
    %367 = vmatprep.subr.mxu0 0.0
    %368 = vmatpush1.msra.mxu0 0.0
    %369 = vmatprep.subr.mxu0 0.0
    %370 = vmatpush1.msra.mxu0 0.0
    %371 = vmatprep.subr.mxu0 0.0
    %372 = vmatpush1.msra.mxu0 0.0
    %373 = vmatprep.subr.mxu0 0.0
    %374 = vmatpush1.msra.mxu0 0.0
    %375 = vmatprep.subr.mxu0 0.0
    %376 = vmatpush1.msra.mxu0 0.0
    %377 = vmatprep.subr.mxu0 0.0
    %378 = vmatpush1.msra.mxu0 0.0
    %379 = vmatprep.subr.mxu0 0.0
    %380 = vmatpush1.msra.mxu0 0.0
    %381 = vmatprep.subr.mxu0 0.0
    %382 = vmatpush1.msra.mxu0 0.0
    %383 = vmatprep.subr.mxu0 0.0
    %384 = vmatpush1.msra.mxu0 0.0
    %385 = vmatprep.subr.mxu0 0.0
    %386 = vmatpush1.msra.mxu0 0.0
    %387 = vmatprep.subr.mxu0 0.0
    %388 = vmatpush1.msra.mxu0 0.0
    %389 = vmatprep.subr.mxu0 0.0
    %390 = vmatpush1.msra.mxu0 0.0
    %391 = vmatprep.subr.mxu0 0.0
    %392 = vmatpush1.msra.mxu0 0.0
    %393 = vmatprep.subr.mxu0 0.0
    %394 = vmatpush1.msra.mxu0 0.0
    %395 = vmatprep.mubr.f32.mxu0 0.0
    %396 = vmatmul.mubr.f32.gmra.mrb[0].mxu0 %v329
    %v397 = vpop.f32.mrb[0].mxu0
    %v398 = vadd.f32 0.0, %v397
    %v399 = vpop.f32.mrb[0].mxu0
    %400 = vdwg.mxu0
    %401 = vrot.lane.b32.xlu0 %v149, 64
    %v402 = vpop.permute.xlu0 %401
    %v405 = vsel %vm155, %v318, 0
    %407 = vmatprep.subr.mxu0 0.0
    %408 = vmatpush1.msra.mxu0 %v402
    %409 = vmatprep.subr.mxu0 0.0
    %410 = vmatpush1.msra.mxu0 0.0
    %411 = vmatprep.subr.mxu0 0.0
    %412 = vmatpush1.msra.mxu0 0.0
    %413 = vmatprep.subr.mxu0 0.0
    %414 = vmatpush1.msra.mxu0 0.0
    %415 = vmatprep.subr.mxu0 0.0
    %416 = vmatpush1.msra.mxu0 0.0
    %417 = vmatprep.subr.mxu0 0.0
    %418 = vmatpush1.msra.mxu0 0.0
    %419 = vmatprep.subr.mxu0 0.0
    %420 = vmatpush1.msra.mxu0 0.0
    %421 = vmatprep.subr.mxu0 0.0
    %422 = vmatpush1.msra.mxu0 0.0
    %423 = vmatprep.subr.mxu0 0.0
    %424 = vmatpush1.msra.mxu0 0.0
    %425 = vmatprep.subr.mxu0 0.0
    %426 = vmatpush1.msra.mxu0 0.0
    %427 = vmatprep.subr.mxu0 0.0
    %428 = vmatpush1.msra.mxu0 0.0
    %429 = vmatprep.subr.mxu0 0.0
    %430 = vmatpush1.msra.mxu0 0.0
    %431 = vmatprep.subr.mxu0 0.0
    %432 = vmatpush1.msra.mxu0 0.0
    %433 = vmatprep.subr.mxu0 0.0
    %434 = vmatpush1.msra.mxu0 0.0
    %435 = vmatprep.subr.mxu0 0.0
    %436 = vmatpush1.msra.mxu0 0.0
    %437 = vmatprep.subr.mxu0 0.0
    %438 = vmatpush1.msra.mxu0 0.0
    %439 = vmatprep.subr.mxu0 0.0
    %440 = vmatpush1.msra.mxu0 0.0
    %441 = vmatprep.subr.mxu0 0.0
    %442 = vmatpush1.msra.mxu0 0.0
    %443 = vmatprep.subr.mxu0 0.0
    %444 = vmatpush1.msra.mxu0 0.0
    %445 = vmatprep.subr.mxu0 0.0
    %446 = vmatpush1.msra.mxu0 0.0
    %447 = vmatprep.subr.mxu0 0.0
    %448 = vmatpush1.msra.mxu0 0.0
    %449 = vmatprep.subr.mxu0 0.0
    %450 = vmatpush1.msra.mxu0 0.0
    %451 = vmatprep.subr.mxu0 0.0
    %452 = vmatpush1.msra.mxu0 0.0
    %453 = vmatprep.subr.mxu0 0.0
    %454 = vmatpush1.msra.mxu0 0.0
    %455 = vmatprep.subr.mxu0 0.0
    %456 = vmatpush1.msra.mxu0 0.0
    %457 = vmatprep.subr.mxu0 0.0
    %458 = vmatpush1.msra.mxu0 0.0
    %459 = vmatprep.subr.mxu0 0.0
    %460 = vmatpush1.msra.mxu0 0.0
    %461 = vmatprep.subr.mxu0 0.0
    %462 = vmatpush1.msra.mxu0 0.0
    %463 = vmatprep.subr.mxu0 0.0
    %464 = vmatpush1.msra.mxu0 0.0
    %465 = vmatprep.subr.mxu0 0.0
    %466 = vmatpush1.msra.mxu0 0.0
    %467 = vmatprep.subr.mxu0 0.0
    %468 = vmatpush1.msra.mxu0 0.0
    %469 = vmatprep.subr.mxu0 0.0
    %470 = vmatpush1.msra.mxu0 0.0
    %471 = vmatprep.mubr.f32.mxu0 0.0
    %472 = vmatmul.mubr.f32.gmra.mrb[0].mxu0 %v405
    %v473 = vpop.f32.mrb[0].mxu0
    %v474 = vadd.f32 0.0, %v473
    %v475 = vpop.f32.mrb[0].mxu0
    %476 = vdwg.mxu0
    %v477 = vrcp.pop %v321
    %v478 = vrcp.pop %v324
    %v479 = vmul.f32 %v398, %v477
    %v480 = vmul.f32 %v474, %v478
    %481 = vrot.lane.b32.xlu0 %v144, 120
    %v482 = vpop.permute.xlu0 %481
    %483 = vrot.lane.b32.xlu0 %v144, 88
    %v484 = vpop.permute.xlu0 %483
    %v485 = vsel %vm155, %v482, 0
    %v487 = vsel %vm155, %v484, 0
    %489 = vmatprep.subr.mxu0 0.0
    %490 = vmatpush1.xpose.msra.mxu0 %v487
    %491 = vmatprep.subr.mxu0 0.0
    %492 = vmatpush1.xpose.msra.mxu0 0.0
    %493 = vmatprep.subr.mxu0 0.0
    %494 = vmatpush1.xpose.msra.mxu0 0.0
    %495 = vmatprep.subr.mxu0 0.0
    %496 = vmatpush1.xpose.msra.mxu0 0.0
    %497 = vmatprep.subr.mxu0 0.0
    %498 = vmatpush1.xpose.msra.mxu0 0.0
    %499 = vmatprep.subr.mxu0 0.0
    %500 = vmatpush1.xpose.msra.mxu0 0.0
    %501 = vmatprep.subr.mxu0 0.0
    %502 = vmatpush1.xpose.msra.mxu0 0.0
    %503 = vmatprep.subr.mxu0 0.0
    %504 = vmatpush1.xpose.msra.mxu0 0.0
    %505 = vmatprep.subr.mxu0 0.0
    %506 = vmatpush1.xpose.msra.mxu0 0.0
    %507 = vmatprep.subr.mxu0 0.0
    %508 = vmatpush1.xpose.msra.mxu0 0.0
    %509 = vmatprep.subr.mxu0 0.0
    %510 = vmatpush1.xpose.msra.mxu0 0.0
    %511 = vmatprep.subr.mxu0 0.0
    %512 = vmatpush1.xpose.msra.mxu0 0.0
    %513 = vmatprep.subr.mxu0 0.0
    %514 = vmatpush1.xpose.msra.mxu0 0.0
    %515 = vmatprep.subr.mxu0 0.0
    %516 = vmatpush1.xpose.msra.mxu0 0.0
    %517 = vmatprep.subr.mxu0 0.0
    %518 = vmatpush1.xpose.msra.mxu0 0.0
    %519 = vmatprep.subr.mxu0 0.0
    %520 = vmatpush1.xpose.msra.mxu0 0.0
    %521 = vmatprep.subr.mxu0 0.0
    %522 = vmatpush1.xpose.msra.mxu0 0.0
    %523 = vmatprep.subr.mxu0 0.0
    %524 = vmatpush1.xpose.msra.mxu0 0.0
    %525 = vmatprep.subr.mxu0 0.0
    %526 = vmatpush1.xpose.msra.mxu0 0.0
    %527 = vmatprep.subr.mxu0 0.0
    %528 = vmatpush1.xpose.msra.mxu0 0.0
    %529 = vmatprep.subr.mxu0 0.0
    %530 = vmatpush1.xpose.msra.mxu0 0.0
    %531 = vmatprep.subr.mxu0 0.0
    %532 = vmatpush1.xpose.msra.mxu0 0.0
    %533 = vmatprep.subr.mxu0 0.0
    %534 = vmatpush1.xpose.msra.mxu0 0.0
    %535 = vmatprep.subr.mxu0 0.0
    %536 = vmatpush1.xpose.msra.mxu0 0.0
    %537 = vmatprep.subr.mxu0 0.0
    %538 = vmatpush1.xpose.msra.mxu0 0.0
    %539 = vmatprep.subr.mxu0 0.0
    %540 = vmatpush1.xpose.msra.mxu0 0.0
    %541 = vmatprep.subr.mxu0 0.0
    %542 = vmatpush1.xpose.msra.mxu0 0.0
    %543 = vmatprep.subr.mxu0 0.0
    %544 = vmatpush1.xpose.msra.mxu0 0.0
    %545 = vmatprep.subr.mxu0 0.0
    %546 = vmatpush1.xpose.msra.mxu0 0.0
    %547 = vmatprep.subr.mxu0 0.0
    %548 = vmatpush1.xpose.msra.mxu0 0.0
    %549 = vmatprep.subr.mxu0 0.0
    %550 = vmatpush1.xpose.msra.mxu0 0.0
    %551 = vmatprep.subr.mxu0 0.0
    %552 = vmatpush1.xpose.msra.mxu0 0.0
    %553 = vmatprep.mubr.f32.mxu0 0.0
    %554 = vmatmul.mubr.f32.gmra.mrb[0].mxu0 %v485
    %v555 = vpop.f32.mrb[0].mxu0
    %v556 = vadd.f32 0.0, %v555
    %v557 = vpop.f32.mrb[0].mxu0
    %558 = vdwg.mxu0
    %559 = vrot.lane.b32.xlu0 %v149, 120
    %v560 = vpop.permute.xlu0 %559
    %561 = vrot.lane.b32.xlu0 %v149, 88
    %v562 = vpop.permute.xlu0 %561
    %v563 = vsel %vm155, %v560, 0
    %v565 = vsel %vm155, %v562, 0
    %567 = vmatprep.subr.mxu0 0.0
    %568 = vmatpush1.xpose.msra.mxu0 %v565
    %569 = vmatprep.subr.mxu0 0.0
    %570 = vmatpush1.xpose.msra.mxu0 0.0
    %571 = vmatprep.subr.mxu0 0.0
    %572 = vmatpush1.xpose.msra.mxu0 0.0
    %573 = vmatprep.subr.mxu0 0.0
    %574 = vmatpush1.xpose.msra.mxu0 0.0
    %575 = vmatprep.subr.mxu0 0.0
    %576 = vmatpush1.xpose.msra.mxu0 0.0
    %577 = vmatprep.subr.mxu0 0.0
    %578 = vmatpush1.xpose.msra.mxu0 0.0
    %579 = vmatprep.subr.mxu0 0.0
    %580 = vmatpush1.xpose.msra.mxu0 0.0
    %581 = vmatprep.subr.mxu0 0.0
    %582 = vmatpush1.xpose.msra.mxu0 0.0
    %583 = vmatprep.subr.mxu0 0.0
    %584 = vmatpush1.xpose.msra.mxu0 0.0
    %585 = vmatprep.subr.mxu0 0.0
    %586 = vmatpush1.xpose.msra.mxu0 0.0
    %587 = vmatprep.subr.mxu0 0.0
    %588 = vmatpush1.xpose.msra.mxu0 0.0
    %589 = vmatprep.subr.mxu0 0.0
    %590 = vmatpush1.xpose.msra.mxu0 0.0
    %591 = vmatprep.subr.mxu0 0.0
    %592 = vmatpush1.xpose.msra.mxu0 0.0
    %593 = vmatprep.subr.mxu0 0.0
    %594 = vmatpush1.xpose.msra.mxu0 0.0
    %595 = vmatprep.subr.mxu0 0.0
    %596 = vmatpush1.xpose.msra.mxu0 0.0
    %597 = vmatprep.subr.mxu0 0.0
    %598 = vmatpush1.xpose.msra.mxu0 0.0
    %599 = vmatprep.subr.mxu0 0.0
    %600 = vmatpush1.xpose.msra.mxu0 0.0
    %601 = vmatprep.subr.mxu0 0.0
    %602 = vmatpush1.xpose.msra.mxu0 0.0
    %603 = vmatprep.subr.mxu0 0.0
    %604 = vmatpush1.xpose.msra.mxu0 0.0
    %605 = vmatprep.subr.mxu0 0.0
    %606 = vmatpush1.xpose.msra.mxu0 0.0
    %607 = vmatprep.subr.mxu0 0.0
    %608 = vmatpush1.xpose.msra.mxu0 0.0
    %609 = vmatprep.subr.mxu0 0.0
    %610 = vmatpush1.xpose.msra.mxu0 0.0
    %611 = vmatprep.subr.mxu0 0.0
    %612 = vmatpush1.xpose.msra.mxu0 0.0
    %613 = vmatprep.subr.mxu0 0.0
    %614 = vmatpush1.xpose.msra.mxu0 0.0
    %615 = vmatprep.subr.mxu0 0.0
    %616 = vmatpush1.xpose.msra.mxu0 0.0
    %617 = vmatprep.subr.mxu0 0.0
    %618 = vmatpush1.xpose.msra.mxu0 0.0
    %619 = vmatprep.subr.mxu0 0.0
    %620 = vmatpush1.xpose.msra.mxu0 0.0
    %621 = vmatprep.subr.mxu0 0.0
    %622 = vmatpush1.xpose.msra.mxu0 0.0
    %623 = vmatprep.subr.mxu0 0.0
    %624 = vmatpush1.xpose.msra.mxu0 0.0
    %625 = vmatprep.subr.mxu0 0.0
    %626 = vmatpush1.xpose.msra.mxu0 0.0
    %627 = vmatprep.subr.mxu0 0.0
    %628 = vmatpush1.xpose.msra.mxu0 0.0
    %629 = vmatprep.subr.mxu0 0.0
    %630 = vmatpush1.xpose.msra.mxu0 0.0
    %631 = vmatprep.mubr.f32.mxu0 0.0
    %632 = vmatmul.mubr.f32.gmra.mrb[0].mxu0 %v563
    %v633 = vpop.f32.mrb[0].mxu0
    %v634 = vadd.f32 0.0, %v633
    %v635 = vpop.f32.mrb[0].mxu0
    %636 = vdwg.mxu0
    %v637 = vsel %vm155, %v556, -inf
    %638 = vmax.xlane.f32.xlu0 %v637
    %v639 = vpop.xlane.xlu0 %638
    %v640 = vsel %vm155, %v634, -inf
    %641 = vmax.xlane.f32.xlu0 %v640
    %v642 = vpop.xlane.xlu0 %641
    %v643 = vsub.f32 %v556, %v639
    %v644 = vsub.f32 %v634, %v642
    %v645 = vmul.f32 %v643, 1.442695
    %v646 = vpow.pop %v645
    %v647 = vmul.f32 %v644, 1.442695
    %v648 = vpow.pop %v647
    %v649 = vsel %vm155, %v646, 0.0
    %650 = vadd.xlane.f32.xlu0 %v649
    %v651 = vpop.xlane.xlu0 %650
    %v652 = vsel %vm155, %v648, 0.0
    %653 = vadd.xlane.f32.xlu0 %v652
    %v654 = vpop.xlane.xlu0 %653
    %655 = vrot.lane.b32.xlu0 %v144, 56
    %v656 = vpop.permute.xlu0 %655
    %v659 = vsel %vm155, %v646, 0
    %661 = vmatprep.subr.mxu0 0.0
    %662 = vmatpush1.msra.mxu0 %v656
    %663 = vmatprep.subr.mxu0 0.0
    %664 = vmatpush1.msra.mxu0 0.0
    %665 = vmatprep.subr.mxu0 0.0
    %666 = vmatpush1.msra.mxu0 0.0
    %667 = vmatprep.subr.mxu0 0.0
    %668 = vmatpush1.msra.mxu0 0.0
    %669 = vmatprep.subr.mxu0 0.0
    %670 = vmatpush1.msra.mxu0 0.0
    %671 = vmatprep.subr.mxu0 0.0
    %672 = vmatpush1.msra.mxu0 0.0
    %673 = vmatprep.subr.mxu0 0.0
    %674 = vmatpush1.msra.mxu0 0.0
    %675 = vmatprep.subr.mxu0 0.0
    %676 = vmatpush1.msra.mxu0 0.0
    %677 = vmatprep.subr.mxu0 0.0
    %678 = vmatpush1.msra.mxu0 0.0
    %679 = vmatprep.subr.mxu0 0.0
    %680 = vmatpush1.msra.mxu0 0.0
    %681 = vmatprep.subr.mxu0 0.0
    %682 = vmatpush1.msra.mxu0 0.0
    %683 = vmatprep.subr.mxu0 0.0
    %684 = vmatpush1.msra.mxu0 0.0
    %685 = vmatprep.subr.mxu0 0.0
    %686 = vmatpush1.msra.mxu0 0.0
    %687 = vmatprep.subr.mxu0 0.0
    %688 = vmatpush1.msra.mxu0 0.0
    %689 = vmatprep.subr.mxu0 0.0
    %690 = vmatpush1.msra.mxu0 0.0
    %691 = vmatprep.subr.mxu0 0.0
    %692 = vmatpush1.msra.mxu0 0.0
    %693 = vmatprep.subr.mxu0 0.0
    %694 = vmatpush1.msra.mxu0 0.0
    %695 = vmatprep.subr.mxu0 0.0
    %696 = vmatpush1.msra.mxu0 0.0
    %697 = vmatprep.subr.mxu0 0.0
    %698 = vmatpush1.msra.mxu0 0.0
    %699 = vmatprep.subr.mxu0 0.0
    %700 = vmatpush1.msra.mxu0 0.0
    %701 = vmatprep.subr.mxu0 0.0
    %702 = vmatpush1.msra.mxu0 0.0
    %703 = vmatprep.subr.mxu0 0.0
    %704 = vmatpush1.msra.mxu0 0.0
    %705 = vmatprep.subr.mxu0 0.0
    %706 = vmatpush1.msra.mxu0 0.0
    %707 = vmatprep.subr.mxu0 0.0
    %708 = vmatpush1.msra.mxu0 0.0
    %709 = vmatprep.subr.mxu0 0.0
    %710 = vmatpush1.msra.mxu0 0.0
    %711 = vmatprep.subr.mxu0 0.0
    %712 = vmatpush1.msra.mxu0 0.0
    %713 = vmatprep.subr.mxu0 0.0
    %714 = vmatpush1.msra.mxu0 0.0
    %715 = vmatprep.subr.mxu0 0.0
    %716 = vmatpush1.msra.mxu0 0.0
    %717 = vmatprep.subr.mxu0 0.0
    %718 = vmatpush1.msra.mxu0 0.0
    %719 = vmatprep.subr.mxu0 0.0
    %720 = vmatpush1.msra.mxu0 0.0
    %721 = vmatprep.subr.mxu0 0.0
    %722 = vmatpush1.msra.mxu0 0.0
    %723 = vmatprep.subr.mxu0 0.0
    %724 = vmatpush1.msra.mxu0 0.0
    %725 = vmatprep.mubr.f32.mxu0 0.0
    %726 = vmatmul.mubr.f32.gmra.mrb[0].mxu0 %v659
    %v727 = vpop.f32.mrb[0].mxu0
    %v728 = vadd.f32 0.0, %v727
    %v729 = vpop.f32.mrb[0].mxu0
    %730 = vdwg.mxu0
    %731 = vrot.lane.b32.xlu0 %v149, 56
    %v732 = vpop.permute.xlu0 %731
    %v735 = vsel %vm155, %v648, 0
    %737 = vmatprep.subr.mxu0 0.0
    %738 = vmatpush1.msra.mxu0 %v732
    %739 = vmatprep.subr.mxu0 0.0
    %740 = vmatpush1.msra.mxu0 0.0
    %741 = vmatprep.subr.mxu0 0.0
    %742 = vmatpush1.msra.mxu0 0.0
    %743 = vmatprep.subr.mxu0 0.0
    %744 = vmatpush1.msra.mxu0 0.0
    %745 = vmatprep.subr.mxu0 0.0
    %746 = vmatpush1.msra.mxu0 0.0
    %747 = vmatprep.subr.mxu0 0.0
    %748 = vmatpush1.msra.mxu0 0.0
    %749 = vmatprep.subr.mxu0 0.0
    %750 = vmatpush1.msra.mxu0 0.0
    %751 = vmatprep.subr.mxu0 0.0
    %752 = vmatpush1.msra.mxu0 0.0
    %753 = vmatprep.subr.mxu0 0.0
    %754 = vmatpush1.msra.mxu0 0.0
    %755 = vmatprep.subr.mxu0 0.0
    %756 = vmatpush1.msra.mxu0 0.0
    %757 = vmatprep.subr.mxu0 0.0
    %758 = vmatpush1.msra.mxu0 0.0
    %759 = vmatprep.subr.mxu0 0.0
    %760 = vmatpush1.msra.mxu0 0.0
    %761 = vmatprep.subr.mxu0 0.0
    %762 = vmatpush1.msra.mxu0 0.0
    %763 = vmatprep.subr.mxu0 0.0
    %764 = vmatpush1.msra.mxu0 0.0
    %765 = vmatprep.subr.mxu0 0.0
    %766 = vmatpush1.msra.mxu0 0.0
    %767 = vmatprep.subr.mxu0 0.0
    %768 = vmatpush1.msra.mxu0 0.0
    %769 = vmatprep.subr.mxu0 0.0
    %770 = vmatpush1.msra.mxu0 0.0
    %771 = vmatprep.subr.mxu0 0.0
    %772 = vmatpush1.msra.mxu0 0.0
    %773 = vmatprep.subr.mxu0 0.0
    %774 = vmatpush1.msra.mxu0 0.0
    %775 = vmatprep.subr.mxu0 0.0
    %776 = vmatpush1.msra.mxu0 0.0
    %777 = vmatprep.subr.mxu0 0.0
    %778 = vmatpush1.msra.mxu0 0.0
    %779 = vmatprep.subr.mxu0 0.0
    %780 = vmatpush1.msra.mxu0 0.0
    %781 = vmatprep.subr.mxu0 0.0
    %782 = vmatpush1.msra.mxu0 0.0
    %783 = vmatprep.subr.mxu0 0.0
    %784 = vmatpush1.msra.mxu0 0.0
    %785 = vmatprep.subr.mxu0 0.0
    %786 = vmatpush1.msra.mxu0 0.0
    %787 = vmatprep.subr.mxu0 0.0
    %788 = vmatpush1.msra.mxu0 0.0
    %789 = vmatprep.subr.mxu0 0.0
    %790 = vmatpush1.msra.mxu0 0.0
    %791 = vmatprep.subr.mxu0 0.0
    %792 = vmatpush1.msra.mxu0 0.0
    %793 = vmatprep.subr.mxu0 0.0
    %794 = vmatpush1.msra.mxu0 0.0
    %795 = vmatprep.subr.mxu0 0.0
    %796 = vmatpush1.msra.mxu0 0.0
    %797 = vmatprep.subr.mxu0 0.0
    %798 = vmatpush1.msra.mxu0 0.0
    %799 = vmatprep.subr.mxu0 0.0
    %800 = vmatpush1.msra.mxu0 0.0
    %801 = vmatprep.mubr.f32.mxu0 0.0
    %802 = vmatmul.mubr.f32.gmra.mrb[0].mxu0 %v735
    %v803 = vpop.f32.mrb[0].mxu0
    %v804 = vadd.f32 0.0, %v803
    %v805 = vpop.f32.mrb[0].mxu0
    %806 = vdwg.mxu0
    %v807 = vrcp.pop %v651
    %v808 = vrcp.pop %v654
    %v809 = vmul.f32 %v728, %v807
    %v810 = vmul.f32 %v804, %v808
    %v812 = vsel %vm155, %v809, 0
    %v815 = vsel %vm155, %v810, 0
    %817 = vmatprep.subr.mxu0 0.0
    %818 = vmatpush1.msra.mxu0 %v66
    %819 = vmatprep.subr.mxu0 0.0
    %820 = vmatpush1.msra.mxu0 0.0
    %821 = vmatprep.subr.mxu0 0.0
    %822 = vmatpush1.msra.mxu0 0.0
    %823 = vmatprep.subr.mxu0 0.0
    %824 = vmatpush1.msra.mxu0 0.0
    %825 = vmatprep.subr.mxu0 0.0
    %826 = vmatpush1.msra.mxu0 0.0
    %827 = vmatprep.subr.mxu0 0.0
    %828 = vmatpush1.msra.mxu0 0.0
    %829 = vmatprep.subr.mxu0 0.0
    %830 = vmatpush1.msra.mxu0 0.0
    %831 = vmatprep.subr.mxu0 0.0
    %832 = vmatpush1.msra.mxu0 0.0
    %833 = vmatprep.subr.mxu0 0.0
    %834 = vmatpush1.msra.mxu0 0.0
    %835 = vmatprep.subr.mxu0 0.0
    %836 = vmatpush1.msra.mxu0 0.0
    %837 = vmatprep.subr.mxu0 0.0
    %838 = vmatpush1.msra.mxu0 0.0
    %839 = vmatprep.subr.mxu0 0.0
    %840 = vmatpush1.msra.mxu0 0.0
    %841 = vmatprep.subr.mxu0 0.0
    %842 = vmatpush1.msra.mxu0 0.0
    %843 = vmatprep.subr.mxu0 0.0
    %844 = vmatpush1.msra.mxu0 0.0
    %845 = vmatprep.subr.mxu0 0.0
    %846 = vmatpush1.msra.mxu0 0.0
    %847 = vmatprep.subr.mxu0 0.0
    %848 = vmatpush1.msra.mxu0 0.0
    %849 = vmatprep.subr.mxu0 0.0
    %850 = vmatpush1.msra.mxu0 0.0
    %851 = vmatprep.subr.mxu0 0.0
    %852 = vmatpush1.msra.mxu0 0.0
    %853 = vmatprep.subr.mxu0 0.0
    %854 = vmatpush1.msra.mxu0 0.0
    %855 = vmatprep.subr.mxu0 0.0
    %856 = vmatpush1.msra.mxu0 0.0
    %857 = vmatprep.subr.mxu0 0.0
    %858 = vmatpush1.msra.mxu0 0.0
    %859 = vmatprep.subr.mxu0 0.0
    %860 = vmatpush1.msra.mxu0 0.0
    %861 = vmatprep.subr.mxu0 0.0
    %862 = vmatpush1.msra.mxu0 0.0
    %863 = vmatprep.subr.mxu0 0.0
    %864 = vmatpush1.msra.mxu0 0.0
    %865 = vmatprep.subr.mxu0 0.0
    %866 = vmatpush1.msra.mxu0 0.0
    %867 = vmatprep.subr.mxu0 0.0
    %868 = vmatpush1.msra.mxu0 0.0
    %869 = vmatprep.subr.mxu0 0.0
    %870 = vmatpush1.msra.mxu0 0.0
    %871 = vmatprep.subr.mxu0 0.0
    %872 = vmatpush1.msra.mxu0 0.0
    %873 = vmatprep.subr.mxu0 0.0
    %874 = vmatpush1.msra.mxu0 0.0
    %875 = vmatprep.subr.mxu0 0.0
    %876 = vmatpush1.msra.mxu0 0.0
    %877 = vmatprep.subr.mxu0 0.0
    %878 = vmatpush1.msra.mxu0 0.0
    %879 = vmatprep.subr.mxu0 0.0
    %880 = vmatpush1.msra.mxu0 0.0
    %881 = vmatprep.mubr.f32.mxu0 0.0
    %882 = vmatmul.mubr.f32.gmra.mrb[0].mxu0 %v812
    %v883 = vpop.f32.mrb[0].mxu0
    %v884 = vadd.f32 0.0, %v883
    %v885 = vpop.f32.mrb[0].mxu0
    %886 = vmatprep.mubr.f32.mxu0 0.0
    %887 = vmatmul.mubr.f32.gmra.mrb[0].mxu0 %v815
    %v888 = vpop.f32.mrb[0].mxu0
    %v889 = vadd.f32 0.0, %v888
    %v890 = vpop.f32.mrb[0].mxu0
    %891 = vdwg.mxu0
    %v893 = vsel %vm155, %v479, 0
    %v896 = vsel %vm155, %v480, 0
    %898 = vmatprep.subr.mxu0 0.0
    %899 = vmatpush1.msra.mxu0 %v65
    %900 = vmatprep.subr.mxu0 0.0
    %901 = vmatpush1.msra.mxu0 0.0
    %902 = vmatprep.subr.mxu0 0.0
    %903 = vmatpush1.msra.mxu0 0.0
    %904 = vmatprep.subr.mxu0 0.0
    %905 = vmatpush1.msra.mxu0 0.0
    %906 = vmatprep.subr.mxu0 0.0
    %907 = vmatpush1.msra.mxu0 0.0
    %908 = vmatprep.subr.mxu0 0.0
    %909 = vmatpush1.msra.mxu0 0.0
    %910 = vmatprep.subr.mxu0 0.0
    %911 = vmatpush1.msra.mxu0 0.0
    %912 = vmatprep.subr.mxu0 0.0
    %913 = vmatpush1.msra.mxu0 0.0
    %914 = vmatprep.subr.mxu0 0.0
    %915 = vmatpush1.msra.mxu0 0.0
    %916 = vmatprep.subr.mxu0 0.0
    %917 = vmatpush1.msra.mxu0 0.0
    %918 = vmatprep.subr.mxu0 0.0
    %919 = vmatpush1.msra.mxu0 0.0
    %920 = vmatprep.subr.mxu0 0.0
    %921 = vmatpush1.msra.mxu0 0.0
    %922 = vmatprep.subr.mxu0 0.0
    %923 = vmatpush1.msra.mxu0 0.0
    %924 = vmatprep.subr.mxu0 0.0
    %925 = vmatpush1.msra.mxu0 0.0
    %926 = vmatprep.subr.mxu0 0.0
    %927 = vmatpush1.msra.mxu0 0.0
    %928 = vmatprep.subr.mxu0 0.0
    %929 = vmatpush1.msra.mxu0 0.0
    %930 = vmatprep.subr.mxu0 0.0
    %931 = vmatpush1.msra.mxu0 0.0
    %932 = vmatprep.subr.mxu0 0.0
    %933 = vmatpush1.msra.mxu0 0.0
    %934 = vmatprep.subr.mxu0 0.0
    %935 = vmatpush1.msra.mxu0 0.0
    %936 = vmatprep.subr.mxu0 0.0
    %937 = vmatpush1.msra.mxu0 0.0
    %938 = vmatprep.subr.mxu0 0.0
    %939 = vmatpush1.msra.mxu0 0.0
    %940 = vmatprep.subr.mxu0 0.0
    %941 = vmatpush1.msra.mxu0 0.0
    %942 = vmatprep.subr.mxu0 0.0
    %943 = vmatpush1.msra.mxu0 0.0
    %944 = vmatprep.subr.mxu0 0.0
    %945 = vmatpush1.msra.mxu0 0.0
    %946 = vmatprep.subr.mxu0 0.0
    %947 = vmatpush1.msra.mxu0 0.0
    %948 = vmatprep.subr.mxu0 0.0
    %949 = vmatpush1.msra.mxu0 0.0
    %950 = vmatprep.subr.mxu0 0.0
    %951 = vmatpush1.msra.mxu0 0.0
    %952 = vmatprep.subr.mxu0 0.0
    %953 = vmatpush1.msra.mxu0 0.0
    %954 = vmatprep.subr.mxu0 0.0
    %955 = vmatpush1.msra.mxu0 0.0
    %956 = vmatprep.subr.mxu0 0.0
    %957 = vmatpush1.msra.mxu0 0.0
    %958 = vmatprep.subr.mxu0 0.0
    %959 = vmatpush1.msra.mxu0 0.0
    %960 = vmatprep.subr.mxu0 0.0
    %961 = vmatpush1.msra.mxu0 0.0
    %962 = vmatprep.mubr.f32.mxu0 0.0
    %963 = vmatmul.mubr.f32.gmra.mrb[0].mxu0 %v893
    %v964 = vpop.f32.mrb[0].mxu0
    %v965 = vadd.f32 %v884, %v964
    %v966 = vpop.f32.mrb[0].mxu0
    %967 = vmatprep.mubr.f32.mxu0 0.0
    %968 = vmatmul.mubr.f32.gmra.mrb[0].mxu0 %v896
    %v969 = vpop.f32.mrb[0].mxu0
    %v970 = vadd.f32 %v889, %v969
    %v971 = vpop.f32.mrb[0].mxu0
    %972 = vdwg.mxu0
    %973 = vrot.lane.b32.xlu0 %v144, 112
    %v974 = vpop.permute.xlu0 %973
    %975 = vrot.lane.b32.xlu0 %v144, 80
    %v976 = vpop.permute.xlu0 %975
    %v977 = vsel %vm155, %v974, 0
    %v979 = vsel %vm155, %v976, 0
    %981 = vmatprep.subr.mxu0 0.0
    %982 = vmatpush1.xpose.msra.mxu0 %v979
    %983 = vmatprep.subr.mxu0 0.0
    %984 = vmatpush1.xpose.msra.mxu0 0.0
    %985 = vmatprep.subr.mxu0 0.0
    %986 = vmatpush1.xpose.msra.mxu0 0.0
    %987 = vmatprep.subr.mxu0 0.0
    %988 = vmatpush1.xpose.msra.mxu0 0.0
    %989 = vmatprep.subr.mxu0 0.0
    %990 = vmatpush1.xpose.msra.mxu0 0.0
    %991 = vmatprep.subr.mxu0 0.0
    %992 = vmatpush1.xpose.msra.mxu0 0.0
    %993 = vmatprep.subr.mxu0 0.0
    %994 = vmatpush1.xpose.msra.mxu0 0.0
    %995 = vmatprep.subr.mxu0 0.0
    %996 = vmatpush1.xpose.msra.mxu0 0.0
    %997 = vmatprep.subr.mxu0 0.0
    %998 = vmatpush1.xpose.msra.mxu0 0.0
    %999 = vmatprep.subr.mxu0 0.0
    %1000 = vmatpush1.xpose.msra.mxu0 0.0
    %1001 = vmatprep.subr.mxu0 0.0
    %1002 = vmatpush1.xpose.msra.mxu0 0.0
    %1003 = vmatprep.subr.mxu0 0.0
    %1004 = vmatpush1.xpose.msra.mxu0 0.0
    %1005 = vmatprep.subr.mxu0 0.0
    %1006 = vmatpush1.xpose.msra.mxu0 0.0
    %1007 = vmatprep.subr.mxu0 0.0
    %1008 = vmatpush1.xpose.msra.mxu0 0.0
    %1009 = vmatprep.subr.mxu0 0.0
    %1010 = vmatpush1.xpose.msra.mxu0 0.0
    %1011 = vmatprep.subr.mxu0 0.0
    %1012 = vmatpush1.xpose.msra.mxu0 0.0
    %1013 = vmatprep.subr.mxu0 0.0
    %1014 = vmatpush1.xpose.msra.mxu0 0.0
    %1015 = vmatprep.subr.mxu0 0.0
    %1016 = vmatpush1.xpose.msra.mxu0 0.0
    %1017 = vmatprep.subr.mxu0 0.0
    %1018 = vmatpush1.xpose.msra.mxu0 0.0
    %1019 = vmatprep.subr.mxu0 0.0
    %1020 = vmatpush1.xpose.msra.mxu0 0.0
    %1021 = vmatprep.subr.mxu0 0.0
    %1022 = vmatpush1.xpose.msra.mxu0 0.0
    %1023 = vmatprep.subr.mxu0 0.0
    %1024 = vmatpush1.xpose.msra.mxu0 0.0
    %1025 = vmatprep.subr.mxu0 0.0
    %1026 = vmatpush1.xpose.msra.mxu0 0.0
    %1027 = vmatprep.subr.mxu0 0.0
    %1028 = vmatpush1.xpose.msra.mxu0 0.0
    %1029 = vmatprep.subr.mxu0 0.0
    %1030 = vmatpush1.xpose.msra.mxu0 0.0
    %1031 = vmatprep.subr.mxu0 0.0
    %1032 = vmatpush1.xpose.msra.mxu0 0.0
    %1033 = vmatprep.subr.mxu0 0.0
    %1034 = vmatpush1.xpose.msra.mxu0 0.0
    %1035 = vmatprep.subr.mxu0 0.0
    %1036 = vmatpush1.xpose.msra.mxu0 0.0
    %1037 = vmatprep.subr.mxu0 0.0
    %1038 = vmatpush1.xpose.msra.mxu0 0.0
    %1039 = vmatprep.subr.mxu0 0.0
    %1040 = vmatpush1.xpose.msra.mxu0 0.0
    %1041 = vmatprep.subr.mxu0 0.0
    %1042 = vmatpush1.xpose.msra.mxu0 0.0
    %1043 = vmatprep.subr.mxu0 0.0
    %1044 = vmatpush1.xpose.msra.mxu0 0.0
    %1045 = vmatprep.mubr.f32.mxu0 0.0
    %1046 = vmatmul.mubr.f32.gmra.mrb[0].mxu0 %v977
    %v1047 = vpop.f32.mrb[0].mxu0
    %v1048 = vadd.f32 0.0, %v1047
    %v1049 = vpop.f32.mrb[0].mxu0
    %1050 = vdwg.mxu0
    %1051 = vrot.lane.b32.xlu0 %v149, 112
    %v1052 = vpop.permute.xlu0 %1051
    %1053 = vrot.lane.b32.xlu0 %v149, 80
    %v1054 = vpop.permute.xlu0 %1053
    %v1055 = vsel %vm155, %v1052, 0
    %v1057 = vsel %vm155, %v1054, 0
    %1059 = vmatprep.subr.mxu0 0.0
    %1060 = vmatpush1.xpose.msra.mxu0 %v1057
    %1061 = vmatprep.subr.mxu0 0.0
    %1062 = vmatpush1.xpose.msra.mxu0 0.0
    %1063 = vmatprep.subr.mxu0 0.0
    %1064 = vmatpush1.xpose.msra.mxu0 0.0
    %1065 = vmatprep.subr.mxu0 0.0
    %1066 = vmatpush1.xpose.msra.mxu0 0.0
    %1067 = vmatprep.subr.mxu0 0.0
    %1068 = vmatpush1.xpose.msra.mxu0 0.0
    %1069 = vmatprep.subr.mxu0 0.0
    %1070 = vmatpush1.xpose.msra.mxu0 0.0
    %1071 = vmatprep.subr.mxu0 0.0
    %1072 = vmatpush1.xpose.msra.mxu0 0.0
    %1073 = vmatprep.subr.mxu0 0.0
    %1074 = vmatpush1.xpose.msra.mxu0 0.0
    %1075 = vmatprep.subr.mxu0 0.0
    %1076 = vmatpush1.xpose.msra.mxu0 0.0
    %1077 = vmatprep.subr.mxu0 0.0
    %1078 = vmatpush1.xpose.msra.mxu0 0.0
    %1079 = vmatprep.subr.mxu0 0.0
    %1080 = vmatpush1.xpose.msra.mxu0 0.0
    %1081 = vmatprep.subr.mxu0 0.0
    %1082 = vmatpush1.xpose.msra.mxu0 0.0
    %1083 = vmatprep.subr.mxu0 0.0
    %1084 = vmatpush1.xpose.msra.mxu0 0.0
    %1085 = vmatprep.subr.mxu0 0.0
    %1086 = vmatpush1.xpose.msra.mxu0 0.0
    %1087 = vmatprep.subr.mxu0 0.0
    %1088 = vmatpush1.xpose.msra.mxu0 0.0
    %1089 = vmatprep.subr.mxu0 0.0
    %1090 = vmatpush1.xpose.msra.mxu0 0.0
    %1091 = vmatprep.subr.mxu0 0.0
    %1092 = vmatpush1.xpose.msra.mxu0 0.0
    %1093 = vmatprep.subr.mxu0 0.0
    %1094 = vmatpush1.xpose.msra.mxu0 0.0
    %1095 = vmatprep.subr.mxu0 0.0
    %1096 = vmatpush1.xpose.msra.mxu0 0.0
    %1097 = vmatprep.subr.mxu0 0.0
    %1098 = vmatpush1.xpose.msra.mxu0 0.0
    %1099 = vmatprep.subr.mxu0 0.0
    %1100 = vmatpush1.xpose.msra.mxu0 0.0
    %1101 = vmatprep.subr.mxu0 0.0
    %1102 = vmatpush1.xpose.msra.mxu0 0.0
    %1103 = vmatprep.subr.mxu0 0.0
    %1104 = vmatpush1.xpose.msra.mxu0 0.0
    %1105 = vmatprep.subr.mxu0 0.0
    %1106 = vmatpush1.xpose.msra.mxu0 0.0
    %1107 = vmatprep.subr.mxu0 0.0
    %1108 = vmatpush1.xpose.msra.mxu0 0.0
    %1109 = vmatprep.subr.mxu0 0.0
    %1110 = vmatpush1.xpose.msra.mxu0 0.0
    %1111 = vmatprep.subr.mxu0 0.0
    %1112 = vmatpush1.xpose.msra.mxu0 0.0
    %1113 = vmatprep.subr.mxu0 0.0
    %1114 = vmatpush1.xpose.msra.mxu0 0.0
    %1115 = vmatprep.subr.mxu0 0.0
    %1116 = vmatpush1.xpose.msra.mxu0 0.0
    %1117 = vmatprep.subr.mxu0 0.0
    %1118 = vmatpush1.xpose.msra.mxu0 0.0
    %1119 = vmatprep.subr.mxu0 0.0
    %1120 = vmatpush1.xpose.msra.mxu0 0.0
    %1121 = vmatprep.subr.mxu0 0.0
    %1122 = vmatpush1.xpose.msra.mxu0 0.0
    %1123 = vmatprep.mubr.f32.mxu0 0.0
    %1124 = vmatmul.mubr.f32.gmra.mrb[0].mxu0 %v1055
    %v1125 = vpop.f32.mrb[0].mxu0
    %v1126 = vadd.f32 0.0, %v1125
    %v1127 = vpop.f32.mrb[0].mxu0
    %1128 = vdwg.mxu0
    %v1129 = vsel %vm155, %v1048, -inf
    %1130 = vmax.xlane.f32.xlu0 %v1129
    %v1131 = vpop.xlane.xlu0 %1130
    %v1132 = vsel %vm155, %v1126, -inf
    %1133 = vmax.xlane.f32.xlu0 %v1132
    %v1134 = vpop.xlane.xlu0 %1133
    %v1135 = vsub.f32 %v1048, %v1131
    %v1136 = vsub.f32 %v1126, %v1134
    %v1137 = vmul.f32 %v1135, 1.442695
    %v1138 = vpow.pop %v1137
    %v1139 = vmul.f32 %v1136, 1.442695
    %v1140 = vpow.pop %v1139
    %v1141 = vsel %vm155, %v1138, 0.0
    %1142 = vadd.xlane.f32.xlu0 %v1141
    %v1143 = vpop.xlane.xlu0 %1142
    %v1144 = vsel %vm155, %v1140, 0.0
    %1145 = vadd.xlane.f32.xlu0 %v1144
    %v1146 = vpop.xlane.xlu0 %1145
    %1147 = vrot.lane.b32.xlu0 %v144, 48
    %v1148 = vpop.permute.xlu0 %1147
    %v1151 = vsel %vm155, %v1138, 0
    %1153 = vmatprep.subr.mxu0 0.0
    %1154 = vmatpush1.msra.mxu0 %v1148
    %1155 = vmatprep.subr.mxu0 0.0
    %1156 = vmatpush1.msra.mxu0 0.0
    %1157 = vmatprep.subr.mxu0 0.0
    %1158 = vmatpush1.msra.mxu0 0.0
    %1159 = vmatprep.subr.mxu0 0.0
    %1160 = vmatpush1.msra.mxu0 0.0
    %1161 = vmatprep.subr.mxu0 0.0
    %1162 = vmatpush1.msra.mxu0 0.0
    %1163 = vmatprep.subr.mxu0 0.0
    %1164 = vmatpush1.msra.mxu0 0.0
    %1165 = vmatprep.subr.mxu0 0.0
    %1166 = vmatpush1.msra.mxu0 0.0
    %1167 = vmatprep.subr.mxu0 0.0
    %1168 = vmatpush1.msra.mxu0 0.0
    %1169 = vmatprep.subr.mxu0 0.0
    %1170 = vmatpush1.msra.mxu0 0.0
    %1171 = vmatprep.subr.mxu0 0.0
    %1172 = vmatpush1.msra.mxu0 0.0
    %1173 = vmatprep.subr.mxu0 0.0
    %1174 = vmatpush1.msra.mxu0 0.0
    %1175 = vmatprep.subr.mxu0 0.0
    %1176 = vmatpush1.msra.mxu0 0.0
    %1177 = vmatprep.subr.mxu0 0.0
    %1178 = vmatpush1.msra.mxu0 0.0
    %1179 = vmatprep.subr.mxu0 0.0
    %1180 = vmatpush1.msra.mxu0 0.0
    %1181 = vmatprep.subr.mxu0 0.0
    %1182 = vmatpush1.msra.mxu0 0.0
    %1183 = vmatprep.subr.mxu0 0.0
    %1184 = vmatpush1.msra.mxu0 0.0
    %1185 = vmatprep.subr.mxu0 0.0
    %1186 = vmatpush1.msra.mxu0 0.0
    %1187 = vmatprep.subr.mxu0 0.0
    %1188 = vmatpush1.msra.mxu0 0.0
    %1189 = vmatprep.subr.mxu0 0.0
    %1190 = vmatpush1.msra.mxu0 0.0
    %1191 = vmatprep.subr.mxu0 0.0
    %1192 = vmatpush1.msra.mxu0 0.0
    %1193 = vmatprep.subr.mxu0 0.0
    %1194 = vmatpush1.msra.mxu0 0.0
    %1195 = vmatprep.subr.mxu0 0.0
    %1196 = vmatpush1.msra.mxu0 0.0
    %1197 = vmatprep.subr.mxu0 0.0
    %1198 = vmatpush1.msra.mxu0 0.0
    %1199 = vmatprep.subr.mxu0 0.0
    %1200 = vmatpush1.msra.mxu0 0.0
    %1201 = vmatprep.subr.mxu0 0.0
    %1202 = vmatpush1.msra.mxu0 0.0
    %1203 = vmatprep.subr.mxu0 0.0
    %1204 = vmatpush1.msra.mxu0 0.0
    %1205 = vmatprep.subr.mxu0 0.0
    %1206 = vmatpush1.msra.mxu0 0.0
    %1207 = vmatprep.subr.mxu0 0.0
    %1208 = vmatpush1.msra.mxu0 0.0
    %1209 = vmatprep.subr.mxu0 0.0
    %1210 = vmatpush1.msra.mxu0 0.0
    %1211 = vmatprep.subr.mxu0 0.0
    %1212 = vmatpush1.msra.mxu0 0.0
    %1213 = vmatprep.subr.mxu0 0.0
    %1214 = vmatpush1.msra.mxu0 0.0
    %1215 = vmatprep.subr.mxu0 0.0
    %1216 = vmatpush1.msra.mxu0 0.0
    %1217 = vmatprep.mubr.f32.mxu0 0.0
    %1218 = vmatmul.mubr.f32.gmra.mrb[0].mxu0 %v1151
    %v1219 = vpop.f32.mrb[0].mxu0
    %v1220 = vadd.f32 0.0, %v1219
    %v1221 = vpop.f32.mrb[0].mxu0
    %1222 = vdwg.mxu0
    %1223 = vrot.lane.b32.xlu0 %v149, 48
    %v1224 = vpop.permute.xlu0 %1223
    %v1227 = vsel %vm155, %v1140, 0
    %1229 = vmatprep.subr.mxu0 0.0
    %1230 = vmatpush1.msra.mxu0 %v1224
    %1231 = vmatprep.subr.mxu0 0.0
    %1232 = vmatpush1.msra.mxu0 0.0
    %1233 = vmatprep.subr.mxu0 0.0
    %1234 = vmatpush1.msra.mxu0 0.0
    %1235 = vmatprep.subr.mxu0 0.0
    %1236 = vmatpush1.msra.mxu0 0.0
    %1237 = vmatprep.subr.mxu0 0.0
    %1238 = vmatpush1.msra.mxu0 0.0
    %1239 = vmatprep.subr.mxu0 0.0
    %1240 = vmatpush1.msra.mxu0 0.0
    %1241 = vmatprep.subr.mxu0 0.0
    %1242 = vmatpush1.msra.mxu0 0.0
    %1243 = vmatprep.subr.mxu0 0.0
    %1244 = vmatpush1.msra.mxu0 0.0
    %1245 = vmatprep.subr.mxu0 0.0
    %1246 = vmatpush1.msra.mxu0 0.0
    %1247 = vmatprep.subr.mxu0 0.0
    %1248 = vmatpush1.msra.mxu0 0.0
    %1249 = vmatprep.subr.mxu0 0.0
    %1250 = vmatpush1.msra.mxu0 0.0
    %1251 = vmatprep.subr.mxu0 0.0
    %1252 = vmatpush1.msra.mxu0 0.0
    %1253 = vmatprep.subr.mxu0 0.0
    %1254 = vmatpush1.msra.mxu0 0.0
    %1255 = vmatprep.subr.mxu0 0.0
    %1256 = vmatpush1.msra.mxu0 0.0
    %1257 = vmatprep.subr.mxu0 0.0
    %1258 = vmatpush1.msra.mxu0 0.0
    %1259 = vmatprep.subr.mxu0 0.0
    %1260 = vmatpush1.msra.mxu0 0.0
    %1261 = vmatprep.subr.mxu0 0.0
    %1262 = vmatpush1.msra.mxu0 0.0
    %1263 = vmatprep.subr.mxu0 0.0
    %1264 = vmatpush1.msra.mxu0 0.0
    %1265 = vmatprep.subr.mxu0 0.0
    %1266 = vmatpush1.msra.mxu0 0.0
    %1267 = vmatprep.subr.mxu0 0.0
    %1268 = vmatpush1.msra.mxu0 0.0
    %1269 = vmatprep.subr.mxu0 0.0
    %1270 = vmatpush1.msra.mxu0 0.0
    %1271 = vmatprep.subr.mxu0 0.0
    %1272 = vmatpush1.msra.mxu0 0.0
    %1273 = vmatprep.subr.mxu0 0.0
    %1274 = vmatpush1.msra.mxu0 0.0
    %1275 = vmatprep.subr.mxu0 0.0
    %1276 = vmatpush1.msra.mxu0 0.0
    %1277 = vmatprep.subr.mxu0 0.0
    %1278 = vmatpush1.msra.mxu0 0.0
    %1279 = vmatprep.subr.mxu0 0.0
    %1280 = vmatpush1.msra.mxu0 0.0
    %1281 = vmatprep.subr.mxu0 0.0
    %1282 = vmatpush1.msra.mxu0 0.0
    %1283 = vmatprep.subr.mxu0 0.0
    %1284 = vmatpush1.msra.mxu0 0.0
    %1285 = vmatprep.subr.mxu0 0.0
    %1286 = vmatpush1.msra.mxu0 0.0
    %1287 = vmatprep.subr.mxu0 0.0
    %1288 = vmatpush1.msra.mxu0 0.0
    %1289 = vmatprep.subr.mxu0 0.0
    %1290 = vmatpush1.msra.mxu0 0.0
    %1291 = vmatprep.subr.mxu0 0.0
    %1292 = vmatpush1.msra.mxu0 0.0
    %1293 = vmatprep.mubr.f32.mxu0 0.0
    %1294 = vmatmul.mubr.f32.gmra.mrb[0].mxu0 %v1227
    %v1295 = vpop.f32.mrb[0].mxu0
    %v1296 = vadd.f32 0.0, %v1295
    %v1297 = vpop.f32.mrb[0].mxu0
    %1298 = vdwg.mxu0
    %v1299 = vrcp.pop %v1143
    %v1300 = vrcp.pop %v1146
    %v1301 = vmul.f32 %v1220, %v1299
    %v1302 = vmul.f32 %v1296, %v1300
    %v1304 = vsel %vm155, %v1301, 0
    %v1307 = vsel %vm155, %v1302, 0
    %1309 = vmatprep.subr.mxu0 0.0
    %1310 = vmatpush1.msra.mxu0 %v67
    %1311 = vmatprep.subr.mxu0 0.0
    %1312 = vmatpush1.msra.mxu0 0.0
    %1313 = vmatprep.subr.mxu0 0.0
    %1314 = vmatpush1.msra.mxu0 0.0
    %1315 = vmatprep.subr.mxu0 0.0
    %1316 = vmatpush1.msra.mxu0 0.0
    %1317 = vmatprep.subr.mxu0 0.0
    %1318 = vmatpush1.msra.mxu0 0.0
    %1319 = vmatprep.subr.mxu0 0.0
    %1320 = vmatpush1.msra.mxu0 0.0
    %1321 = vmatprep.subr.mxu0 0.0
    %1322 = vmatpush1.msra.mxu0 0.0
    %1323 = vmatprep.subr.mxu0 0.0
    %1324 = vmatpush1.msra.mxu0 0.0
    %1325 = vmatprep.subr.mxu0 0.0
    %1326 = vmatpush1.msra.mxu0 0.0
    %1327 = vmatprep.subr.mxu0 0.0
    %1328 = vmatpush1.msra.mxu0 0.0
    %1329 = vmatprep.subr.mxu0 0.0
    %1330 = vmatpush1.msra.mxu0 0.0
    %1331 = vmatprep.subr.mxu0 0.0
    %1332 = vmatpush1.msra.mxu0 0.0
    %1333 = vmatprep.subr.mxu0 0.0
    %1334 = vmatpush1.msra.mxu0 0.0
    %1335 = vmatprep.subr.mxu0 0.0
    %1336 = vmatpush1.msra.mxu0 0.0
    %1337 = vmatprep.subr.mxu0 0.0
    %1338 = vmatpush1.msra.mxu0 0.0
    %1339 = vmatprep.subr.mxu0 0.0
    %1340 = vmatpush1.msra.mxu0 0.0
    %1341 = vmatprep.subr.mxu0 0.0
    %1342 = vmatpush1.msra.mxu0 0.0
    %1343 = vmatprep.subr.mxu0 0.0
    %1344 = vmatpush1.msra.mxu0 0.0
    %1345 = vmatprep.subr.mxu0 0.0
    %1346 = vmatpush1.msra.mxu0 0.0
    %1347 = vmatprep.subr.mxu0 0.0
    %1348 = vmatpush1.msra.mxu0 0.0
    %1349 = vmatprep.subr.mxu0 0.0
    %1350 = vmatpush1.msra.mxu0 0.0
    %1351 = vmatprep.subr.mxu0 0.0
    %1352 = vmatpush1.msra.mxu0 0.0
    %1353 = vmatprep.subr.mxu0 0.0
    %1354 = vmatpush1.msra.mxu0 0.0
    %1355 = vmatprep.subr.mxu0 0.0
    %1356 = vmatpush1.msra.mxu0 0.0
    %1357 = vmatprep.subr.mxu0 0.0
    %1358 = vmatpush1.msra.mxu0 0.0
    %1359 = vmatprep.subr.mxu0 0.0
    %1360 = vmatpush1.msra.mxu0 0.0
    %1361 = vmatprep.subr.mxu0 0.0
    %1362 = vmatpush1.msra.mxu0 0.0
    %1363 = vmatprep.subr.mxu0 0.0
    %1364 = vmatpush1.msra.mxu0 0.0
    %1365 = vmatprep.subr.mxu0 0.0
    %1366 = vmatpush1.msra.mxu0 0.0
    %1367 = vmatprep.subr.mxu0 0.0
    %1368 = vmatpush1.msra.mxu0 0.0
    %1369 = vmatprep.subr.mxu0 0.0
    %1370 = vmatpush1.msra.mxu0 0.0
    %1371 = vmatprep.subr.mxu0 0.0
    %1372 = vmatpush1.msra.mxu0 0.0
    %1373 = vmatprep.mubr.f32.mxu0 0.0
    %1374 = vmatmul.mubr.f32.gmra.mrb[0].mxu0 %v1304
    %v1375 = vpop.f32.mrb[0].mxu0
    %v1376 = vadd.f32 0.0, %v1375
    %v1377 = vpop.f32.mrb[0].mxu0
    %1378 = vmatprep.mubr.f32.mxu0 0.0
    %1379 = vmatmul.mubr.f32.gmra.mrb[0].mxu0 %v1307
    %v1380 = vpop.f32.mrb[0].mxu0
    %v1381 = vadd.f32 0.0, %v1380
    %v1382 = vpop.f32.mrb[0].mxu0
    %1383 = vdwg.mxu0
    %v1384 = vadd.f32 %v965, %v1376
    %v1385 = vadd.f32 %v970, %v1381
    %1386 = vrot.lane.b32.xlu0 %v144, 104
    %v1387 = vpop.permute.xlu0 %1386
    %1388 = vrot.lane.b32.xlu0 %v144, 72
    %v1389 = vpop.permute.xlu0 %1388
    %v1390 = vsel %vm155, %v1387, 0
    %v1392 = vsel %vm155, %v1389, 0
    %1394 = vmatprep.subr.mxu0 0.0
    %1395 = vmatpush1.xpose.msra.mxu0 %v1392
    %1396 = vmatprep.subr.mxu0 0.0
    %1397 = vmatpush1.xpose.msra.mxu0 0.0
    %1398 = vmatprep.subr.mxu0 0.0
    %1399 = vmatpush1.xpose.msra.mxu0 0.0
    %1400 = vmatprep.subr.mxu0 0.0
    %1401 = vmatpush1.xpose.msra.mxu0 0.0
    %1402 = vmatprep.subr.mxu0 0.0
    %1403 = vmatpush1.xpose.msra.mxu0 0.0
    %1404 = vmatprep.subr.mxu0 0.0
    %1405 = vmatpush1.xpose.msra.mxu0 0.0
    %1406 = vmatprep.subr.mxu0 0.0
    %1407 = vmatpush1.xpose.msra.mxu0 0.0
    %1408 = vmatprep.subr.mxu0 0.0
    %1409 = vmatpush1.xpose.msra.mxu0 0.0
    %1410 = vmatprep.subr.mxu0 0.0
    %1411 = vmatpush1.xpose.msra.mxu0 0.0
    %1412 = vmatprep.subr.mxu0 0.0
    %1413 = vmatpush1.xpose.msra.mxu0 0.0
    %1414 = vmatprep.subr.mxu0 0.0
    %1415 = vmatpush1.xpose.msra.mxu0 0.0
    %1416 = vmatprep.subr.mxu0 0.0
    %1417 = vmatpush1.xpose.msra.mxu0 0.0
    %1418 = vmatprep.subr.mxu0 0.0
    %1419 = vmatpush1.xpose.msra.mxu0 0.0
    %1420 = vmatprep.subr.mxu0 0.0
    %1421 = vmatpush1.xpose.msra.mxu0 0.0
    %1422 = vmatprep.subr.mxu0 0.0
    %1423 = vmatpush1.xpose.msra.mxu0 0.0
    %1424 = vmatprep.subr.mxu0 0.0
    %1425 = vmatpush1.xpose.msra.mxu0 0.0
    %1426 = vmatprep.subr.mxu0 0.0
    %1427 = vmatpush1.xpose.msra.mxu0 0.0
    %1428 = vmatprep.subr.mxu0 0.0
    %1429 = vmatpush1.xpose.msra.mxu0 0.0
    %1430 = vmatprep.subr.mxu0 0.0
    %1431 = vmatpush1.xpose.msra.mxu0 0.0
    %1432 = vmatprep.subr.mxu0 0.0
    %1433 = vmatpush1.xpose.msra.mxu0 0.0
    %1434 = vmatprep.subr.mxu0 0.0
    %1435 = vmatpush1.xpose.msra.mxu0 0.0
    %1436 = vmatprep.subr.mxu0 0.0
    %1437 = vmatpush1.xpose.msra.mxu0 0.0
    %1438 = vmatprep.subr.mxu0 0.0
    %1439 = vmatpush1.xpose.msra.mxu0 0.0
    %1440 = vmatprep.subr.mxu0 0.0
    %1441 = vmatpush1.xpose.msra.mxu0 0.0
    %1442 = vmatprep.subr.mxu0 0.0
    %1443 = vmatpush1.xpose.msra.mxu0 0.0
    %1444 = vmatprep.subr.mxu0 0.0
    %1445 = vmatpush1.xpose.msra.mxu0 0.0
    %1446 = vmatprep.subr.mxu0 0.0
    %1447 = vmatpush1.xpose.msra.mxu0 0.0
    %1448 = vmatprep.subr.mxu0 0.0
    %1449 = vmatpush1.xpose.msra.mxu0 0.0
    %1450 = vmatprep.subr.mxu0 0.0
    %1451 = vmatpush1.xpose.msra.mxu0 0.0
    %1452 = vmatprep.subr.mxu0 0.0
    %1453 = vmatpush1.xpose.msra.mxu0 0.0
    %1454 = vmatprep.subr.mxu0 0.0
    %1455 = vmatpush1.xpose.msra.mxu0 0.0
    %1456 = vmatprep.subr.mxu0 0.0
    %1457 = vmatpush1.xpose.msra.mxu0 0.0
    %1458 = vmatprep.mubr.f32.mxu0 0.0
    %1459 = vmatmul.mubr.f32.gmra.mrb[0].mxu0 %v1390
    %v1460 = vpop.f32.mrb[0].mxu0
    %v1461 = vadd.f32 0.0, %v1460
    %v1462 = vpop.f32.mrb[0].mxu0
    %1463 = vdwg.mxu0
    %1464 = vrot.lane.b32.xlu0 %v149, 104
    %v1465 = vpop.permute.xlu0 %1464
    %1466 = vrot.lane.b32.xlu0 %v149, 72
    %v1467 = vpop.permute.xlu0 %1466
    %v1468 = vsel %vm155, %v1465, 0
    %v1470 = vsel %vm155, %v1467, 0
    %1472 = vmatprep.subr.mxu0 0.0
    %1473 = vmatpush1.xpose.msra.mxu0 %v1470
    %1474 = vmatprep.subr.mxu0 0.0
    %1475 = vmatpush1.xpose.msra.mxu0 0.0
    %1476 = vmatprep.subr.mxu0 0.0
    %1477 = vmatpush1.xpose.msra.mxu0 0.0
    %1478 = vmatprep.subr.mxu0 0.0
    %1479 = vmatpush1.xpose.msra.mxu0 0.0
    %1480 = vmatprep.subr.mxu0 0.0
    %1481 = vmatpush1.xpose.msra.mxu0 0.0
    %1482 = vmatprep.subr.mxu0 0.0
    %1483 = vmatpush1.xpose.msra.mxu0 0.0
    %1484 = vmatprep.subr.mxu0 0.0
    %1485 = vmatpush1.xpose.msra.mxu0 0.0
    %1486 = vmatprep.subr.mxu0 0.0
    %1487 = vmatpush1.xpose.msra.mxu0 0.0
    %1488 = vmatprep.subr.mxu0 0.0
    %1489 = vmatpush1.xpose.msra.mxu0 0.0
    %1490 = vmatprep.subr.mxu0 0.0
    %1491 = vmatpush1.xpose.msra.mxu0 0.0
    %1492 = vmatprep.subr.mxu0 0.0
    %1493 = vmatpush1.xpose.msra.mxu0 0.0
    %1494 = vmatprep.subr.mxu0 0.0
    %1495 = vmatpush1.xpose.msra.mxu0 0.0
    %1496 = vmatprep.subr.mxu0 0.0
    %1497 = vmatpush1.xpose.msra.mxu0 0.0
    %1498 = vmatprep.subr.mxu0 0.0
    %1499 = vmatpush1.xpose.msra.mxu0 0.0
    %1500 = vmatprep.subr.mxu0 0.0
    %1501 = vmatpush1.xpose.msra.mxu0 0.0
    %1502 = vmatprep.subr.mxu0 0.0
    %1503 = vmatpush1.xpose.msra.mxu0 0.0
    %1504 = vmatprep.subr.mxu0 0.0
    %1505 = vmatpush1.xpose.msra.mxu0 0.0
    %1506 = vmatprep.subr.mxu0 0.0
    %1507 = vmatpush1.xpose.msra.mxu0 0.0
    %1508 = vmatprep.subr.mxu0 0.0
    %1509 = vmatpush1.xpose.msra.mxu0 0.0
    %1510 = vmatprep.subr.mxu0 0.0
    %1511 = vmatpush1.xpose.msra.mxu0 0.0
    %1512 = vmatprep.subr.mxu0 0.0
    %1513 = vmatpush1.xpose.msra.mxu0 0.0
    %1514 = vmatprep.subr.mxu0 0.0
    %1515 = vmatpush1.xpose.msra.mxu0 0.0
    %1516 = vmatprep.subr.mxu0 0.0
    %1517 = vmatpush1.xpose.msra.mxu0 0.0
    %1518 = vmatprep.subr.mxu0 0.0
    %1519 = vmatpush1.xpose.msra.mxu0 0.0
    %1520 = vmatprep.subr.mxu0 0.0
    %1521 = vmatpush1.xpose.msra.mxu0 0.0
    %1522 = vmatprep.subr.mxu0 0.0
    %1523 = vmatpush1.xpose.msra.mxu0 0.0
    %1524 = vmatprep.subr.mxu0 0.0
    %1525 = vmatpush1.xpose.msra.mxu0 0.0
    %1526 = vmatprep.subr.mxu0 0.0
    %1527 = vmatpush1.xpose.msra.mxu0 0.0
    %1528 = vmatprep.subr.mxu0 0.0
    %1529 = vmatpush1.xpose.msra.mxu0 0.0
    %1530 = vmatprep.subr.mxu0 0.0
    %1531 = vmatpush1.xpose.msra.mxu0 0.0
    %1532 = vmatprep.subr.mxu0 0.0
    %1533 = vmatpush1.xpose.msra.mxu0 0.0
    %1534 = vmatprep.subr.mxu0 0.0
    %1535 = vmatpush1.xpose.msra.mxu0 0.0
    %1536 = vmatprep.mubr.f32.mxu0 0.0
    %1537 = vmatmul.mubr.f32.gmra.mrb[0].mxu0 %v1468
    %v1538 = vpop.f32.mrb[0].mxu0
    %v1539 = vadd.f32 0.0, %v1538
    %v1540 = vpop.f32.mrb[0].mxu0
    %1541 = vdwg.mxu0
    %v1542 = vsel %vm155, %v1461, -inf
    %1543 = vmax.xlane.f32.xlu0 %v1542
    %v1544 = vpop.xlane.xlu0 %1543
    %v1545 = vsel %vm155, %v1539, -inf
    %1546 = vmax.xlane.f32.xlu0 %v1545
    %v1547 = vpop.xlane.xlu0 %1546
    %v1548 = vsub.f32 %v1461, %v1544
    %v1549 = vsub.f32 %v1539, %v1547
    %v1550 = vmul.f32 %v1548, 1.442695
    %v1551 = vpow.pop %v1550
    %v1552 = vmul.f32 %v1549, 1.442695
    %v1553 = vpow.pop %v1552
    %v1554 = vsel %vm155, %v1551, 0.0
    %1555 = vadd.xlane.f32.xlu0 %v1554
    %v1556 = vpop.xlane.xlu0 %1555
    %v1557 = vsel %vm155, %v1553, 0.0
    %1558 = vadd.xlane.f32.xlu0 %v1557
    %v1559 = vpop.xlane.xlu0 %1558
    %1560 = vrot.lane.b32.xlu0 %v144, 40
    %v1561 = vpop.permute.xlu0 %1560
    %v1564 = vsel %vm155, %v1551, 0
    %1566 = vmatprep.subr.mxu0 0.0
    %1567 = vmatpush1.msra.mxu0 %v1561
    %1568 = vmatprep.subr.mxu0 0.0
    %1569 = vmatpush1.msra.mxu0 0.0
    %1570 = vmatprep.subr.mxu0 0.0
    %1571 = vmatpush1.msra.mxu0 0.0
    %1572 = vmatprep.subr.mxu0 0.0
    %1573 = vmatpush1.msra.mxu0 0.0
    %1574 = vmatprep.subr.mxu0 0.0
    %1575 = vmatpush1.msra.mxu0 0.0
    %1576 = vmatprep.subr.mxu0 0.0
    %1577 = vmatpush1.msra.mxu0 0.0
    %1578 = vmatprep.subr.mxu0 0.0
    %1579 = vmatpush1.msra.mxu0 0.0
    %1580 = vmatprep.subr.mxu0 0.0
    %1581 = vmatpush1.msra.mxu0 0.0
    %1582 = vmatprep.subr.mxu0 0.0
    %1583 = vmatpush1.msra.mxu0 0.0
    %1584 = vmatprep.subr.mxu0 0.0
    %1585 = vmatpush1.msra.mxu0 0.0
    %1586 = vmatprep.subr.mxu0 0.0
    %1587 = vmatpush1.msra.mxu0 0.0
    %1588 = vmatprep.subr.mxu0 0.0
    %1589 = vmatpush1.msra.mxu0 0.0
    %1590 = vmatprep.subr.mxu0 0.0
    %1591 = vmatpush1.msra.mxu0 0.0
    %1592 = vmatprep.subr.mxu0 0.0
    %1593 = vmatpush1.msra.mxu0 0.0
    %1594 = vmatprep.subr.mxu0 0.0
    %1595 = vmatpush1.msra.mxu0 0.0
    %1596 = vmatprep.subr.mxu0 0.0
    %1597 = vmatpush1.msra.mxu0 0.0
    %1598 = vmatprep.subr.mxu0 0.0
    %1599 = vmatpush1.msra.mxu0 0.0
    %1600 = vmatprep.subr.mxu0 0.0
    %1601 = vmatpush1.msra.mxu0 0.0
    %1602 = vmatprep.subr.mxu0 0.0
    %1603 = vmatpush1.msra.mxu0 0.0
    %1604 = vmatprep.subr.mxu0 0.0
    %1605 = vmatpush1.msra.mxu0 0.0
    %1606 = vmatprep.subr.mxu0 0.0
    %1607 = vmatpush1.msra.mxu0 0.0
    %1608 = vmatprep.subr.mxu0 0.0
    %1609 = vmatpush1.msra.mxu0 0.0
    %1610 = vmatprep.subr.mxu0 0.0
    %1611 = vmatpush1.msra.mxu0 0.0
    %1612 = vmatprep.subr.mxu0 0.0
    %1613 = vmatpush1.msra.mxu0 0.0
    %1614 = vmatprep.subr.mxu0 0.0
    %1615 = vmatpush1.msra.mxu0 0.0
    %1616 = vmatprep.subr.mxu0 0.0
    %1617 = vmatpush1.msra.mxu0 0.0
    %1618 = vmatprep.subr.mxu0 0.0
    %1619 = vmatpush1.msra.mxu0 0.0
    %1620 = vmatprep.subr.mxu0 0.0
    %1621 = vmatpush1.msra.mxu0 0.0
    %1622 = vmatprep.subr.mxu0 0.0
    %1623 = vmatpush1.msra.mxu0 0.0
    %1624 = vmatprep.subr.mxu0 0.0
    %1625 = vmatpush1.msra.mxu0 0.0
    %1626 = vmatprep.subr.mxu0 0.0
    %1627 = vmatpush1.msra.mxu0 0.0
    %1628 = vmatprep.subr.mxu0 0.0
    %1629 = vmatpush1.msra.mxu0 0.0
    %1630 = vmatprep.mubr.f32.mxu0 0.0
    %1631 = vmatmul.mubr.f32.gmra.mrb[0].mxu0 %v1564
    %v1632 = vpop.f32.mrb[0].mxu0
    %v1633 = vadd.f32 0.0, %v1632
    %v1634 = vpop.f32.mrb[0].mxu0
    %1635 = vdwg.mxu0
    %1636 = vrot.lane.b32.xlu0 %v149, 40
    %v1637 = vpop.permute.xlu0 %1636
    %v1640 = vsel %vm155, %v1553, 0
    %1642 = vmatprep.subr.mxu0 0.0
    %1643 = vmatpush1.msra.mxu0 %v1637
    %1644 = vmatprep.subr.mxu0 0.0
    %1645 = vmatpush1.msra.mxu0 0.0
    %1646 = vmatprep.subr.mxu0 0.0
    %1647 = vmatpush1.msra.mxu0 0.0
    %1648 = vmatprep.subr.mxu0 0.0
    %1649 = vmatpush1.msra.mxu0 0.0
    %1650 = vmatprep.subr.mxu0 0.0
    %1651 = vmatpush1.msra.mxu0 0.0
    %1652 = vmatprep.subr.mxu0 0.0
    %1653 = vmatpush1.msra.mxu0 0.0
    %1654 = vmatprep.subr.mxu0 0.0
    %1655 = vmatpush1.msra.mxu0 0.0
    %1656 = vmatprep.subr.mxu0 0.0
    %1657 = vmatpush1.msra.mxu0 0.0
    %1658 = vmatprep.subr.mxu0 0.0
    %1659 = vmatpush1.msra.mxu0 0.0
    %1660 = vmatprep.subr.mxu0 0.0
    %1661 = vmatpush1.msra.mxu0 0.0
    %1662 = vmatprep.subr.mxu0 0.0
    %1663 = vmatpush1.msra.mxu0 0.0
    %1664 = vmatprep.subr.mxu0 0.0
    %1665 = vmatpush1.msra.mxu0 0.0
    %1666 = vmatprep.subr.mxu0 0.0
    %1667 = vmatpush1.msra.mxu0 0.0
    %1668 = vmatprep.subr.mxu0 0.0
    %1669 = vmatpush1.msra.mxu0 0.0
    %1670 = vmatprep.subr.mxu0 0.0
    %1671 = vmatpush1.msra.mxu0 0.0
    %1672 = vmatprep.subr.mxu0 0.0
    %1673 = vmatpush1.msra.mxu0 0.0
    %1674 = vmatprep.subr.mxu0 0.0
    %1675 = vmatpush1.msra.mxu0 0.0
    %1676 = vmatprep.subr.mxu0 0.0
    %1677 = vmatpush1.msra.mxu0 0.0
    %1678 = vmatprep.subr.mxu0 0.0
    %1679 = vmatpush1.msra.mxu0 0.0
    %1680 = vmatprep.subr.mxu0 0.0
    %1681 = vmatpush1.msra.mxu0 0.0
    %1682 = vmatprep.subr.mxu0 0.0
    %1683 = vmatpush1.msra.mxu0 0.0
    %1684 = vmatprep.subr.mxu0 0.0
    %1685 = vmatpush1.msra.mxu0 0.0
    %1686 = vmatprep.subr.mxu0 0.0
    %1687 = vmatpush1.msra.mxu0 0.0
    %1688 = vmatprep.subr.mxu0 0.0
    %1689 = vmatpush1.msra.mxu0 0.0
    %1690 = vmatprep.subr.mxu0 0.0
    %1691 = vmatpush1.msra.mxu0 0.0
    %1692 = vmatprep.subr.mxu0 0.0
    %1693 = vmatpush1.msra.mxu0 0.0
    %1694 = vmatprep.subr.mxu0 0.0
    %1695 = vmatpush1.msra.mxu0 0.0
    %1696 = vmatprep.subr.mxu0 0.0
    %1697 = vmatpush1.msra.mxu0 0.0
    %1698 = vmatprep.subr.mxu0 0.0
    %1699 = vmatpush1.msra.mxu0 0.0
    %1700 = vmatprep.subr.mxu0 0.0
    %1701 = vmatpush1.msra.mxu0 0.0
    %1702 = vmatprep.subr.mxu0 0.0
    %1703 = vmatpush1.msra.mxu0 0.0
    %1704 = vmatprep.subr.mxu0 0.0
    %1705 = vmatpush1.msra.mxu0 0.0
    %1706 = vmatprep.mubr.f32.mxu0 0.0
    %1707 = vmatmul.mubr.f32.gmra.mrb[0].mxu0 %v1640
    %v1708 = vpop.f32.mrb[0].mxu0
    %v1709 = vadd.f32 0.0, %v1708
    %v1710 = vpop.f32.mrb[0].mxu0
    %1711 = vdwg.mxu0
    %v1712 = vrcp.pop %v1556
    %v1713 = vrcp.pop %v1559
    %v1714 = vmul.f32 %v1633, %v1712
    %v1715 = vmul.f32 %v1709, %v1713
    %v1717 = vsel %vm155, %v1714, 0
    %v1720 = vsel %vm155, %v1715, 0
    %1722 = vmatprep.subr.mxu0 0.0
    %1723 = vmatpush1.msra.mxu0 %v68
    %1724 = vmatprep.subr.mxu0 0.0
    %1725 = vmatpush1.msra.mxu0 0.0
    %1726 = vmatprep.subr.mxu0 0.0
    %1727 = vmatpush1.msra.mxu0 0.0
    %1728 = vmatprep.subr.mxu0 0.0
    %1729 = vmatpush1.msra.mxu0 0.0
    %1730 = vmatprep.subr.mxu0 0.0
    %1731 = vmatpush1.msra.mxu0 0.0
    %1732 = vmatprep.subr.mxu0 0.0
    %1733 = vmatpush1.msra.mxu0 0.0
    %1734 = vmatprep.subr.mxu0 0.0
    %1735 = vmatpush1.msra.mxu0 0.0
    %1736 = vmatprep.subr.mxu0 0.0
    %1737 = vmatpush1.msra.mxu0 0.0
    %1738 = vmatprep.subr.mxu0 0.0
    %1739 = vmatpush1.msra.mxu0 0.0
    %1740 = vmatprep.subr.mxu0 0.0
    %1741 = vmatpush1.msra.mxu0 0.0
    %1742 = vmatprep.subr.mxu0 0.0
    %1743 = vmatpush1.msra.mxu0 0.0
    %1744 = vmatprep.subr.mxu0 0.0
    %1745 = vmatpush1.msra.mxu0 0.0
    %1746 = vmatprep.subr.mxu0 0.0
    %1747 = vmatpush1.msra.mxu0 0.0
    %1748 = vmatprep.subr.mxu0 0.0
    %1749 = vmatpush1.msra.mxu0 0.0
    %1750 = vmatprep.subr.mxu0 0.0
    %1751 = vmatpush1.msra.mxu0 0.0
    %1752 = vmatprep.subr.mxu0 0.0
    %1753 = vmatpush1.msra.mxu0 0.0
    %1754 = vmatprep.subr.mxu0 0.0
    %1755 = vmatpush1.msra.mxu0 0.0
    %1756 = vmatprep.subr.mxu0 0.0
    %1757 = vmatpush1.msra.mxu0 0.0
    %1758 = vmatprep.subr.mxu0 0.0
    %1759 = vmatpush1.msra.mxu0 0.0
    %1760 = vmatprep.subr.mxu0 0.0
    %1761 = vmatpush1.msra.mxu0 0.0
    %1762 = vmatprep.subr.mxu0 0.0
    %1763 = vmatpush1.msra.mxu0 0.0
    %1764 = vmatprep.subr.mxu0 0.0
    %1765 = vmatpush1.msra.mxu0 0.0
    %1766 = vmatprep.subr.mxu0 0.0
    %1767 = vmatpush1.msra.mxu0 0.0
    %1768 = vmatprep.subr.mxu0 0.0
    %1769 = vmatpush1.msra.mxu0 0.0
    %1770 = vmatprep.subr.mxu0 0.0
    %1771 = vmatpush1.msra.mxu0 0.0
    %1772 = vmatprep.subr.mxu0 0.0
    %1773 = vmatpush1.msra.mxu0 0.0
    %1774 = vmatprep.subr.mxu0 0.0
    %1775 = vmatpush1.msra.mxu0 0.0
    %1776 = vmatprep.subr.mxu0 0.0
    %1777 = vmatpush1.msra.mxu0 0.0
    %1778 = vmatprep.subr.mxu0 0.0
    %1779 = vmatpush1.msra.mxu0 0.0
    %1780 = vmatprep.subr.mxu0 0.0
    %1781 = vmatpush1.msra.mxu0 0.0
    %1782 = vmatprep.subr.mxu0 0.0
    %1783 = vmatpush1.msra.mxu0 0.0
    %1784 = vmatprep.subr.mxu0 0.0
    %1785 = vmatpush1.msra.mxu0 0.0
    %1786 = vmatprep.mubr.f32.mxu0 0.0
    %1787 = vmatmul.mubr.f32.gmra.mrb[0].mxu0 %v1717
    %v1788 = vpop.f32.mrb[0].mxu0
    %v1789 = vadd.f32 0.0, %v1788
    %v1790 = vpop.f32.mrb[0].mxu0
    %1791 = vmatprep.mubr.f32.mxu0 0.0
    %1792 = vmatmul.mubr.f32.gmra.mrb[0].mxu0 %v1720
    %v1793 = vpop.f32.mrb[0].mxu0
    %v1794 = vadd.f32 0.0, %v1793
    %v1795 = vpop.f32.mrb[0].mxu0
    %1796 = vdwg.mxu0
    %v1797 = vadd.f32 %v1384, %v1789
    %v1798 = vadd.f32 %v1385, %v1794
    %v1800 = vlaneseq
    %v1801 = vshrl.u32 %v1800, 7
    %v1802 = vsub.s32 0, %v1801
    %v1803 = vrot.slane %v69, %v1802
    %v1805 = vadd.f32 %v1797, %v1803
    %v1806 = vadd.f32 %v1798, %v1803
    %1807 = vst.msk [vmem:[#allocation8] sm:$0xff] %vm70, %v1805
    %1808 = vst.msk [vmem:[#allocation8 + $0x8] sm:$0xff] %vm70, %v1806
    // Predicated region
    $region30: #{tpu_custom_call.1} parent=1 // pred_check
      _
    $region31: #{tpu_custom_call.1} parent=1 // pred_check_branch
      %1810 = sbr.rel (0) target = $region33
    $region32: #{tpu_custom_call.1} parent=1 // pred_region
      %s1812 = ssub.s32 256, 256
      %1813 = vsyncadd [#allocation4], %s1812
      %s1814 = sshll.u32 [#allocation8], 4
      %s1815 = int_to_ptr.vmem [resolvable:$true] %s1814
      %1820 = dma.vmem_to_hbm [thread:$0]  %s1815, 256, %s4, [#allocation4], 128, 128, 8
    $region33: #{tpu_custom_call.1} parent=1 // pred_fallthru
      _
    // Predicated region
    $region34: #{tpu_custom_call.1} parent=1 // pred_check
      _
    $region35: #{tpu_custom_call.1} parent=1 // pred_check_branch
      %1822 = sbr.rel (0) target = $region37
    $region36: #{tpu_custom_call.1} parent=1 // pred_region
      %1823 = dma.done [#allocation4], 256
    $region37: #{tpu_custom_call.1} parent=1 // pred_fallthru
      _
    %1824 = vsyncpa [#allocation3], 1
    %1825 = vsyncpa [#allocation6], 1
    %1826 = vsyncpa [#allocation4], 1

</llo_original>
